<compile_context>
chip_gen: v7x
topology: tpu7x:2x2x1
jax: 0.10.0
libtpu: 0.0.40
codegen_flags: <defaults>
</compile_context>

<pallas_src>
import math
import jax
import jax.numpy as jnp
from jax.experimental import pallas as pl
from jax.experimental.pallas import tpu as pltpu


# ---------------------------------------------------------------------------
# deterministic parameter construction (PyTorch Linear-style uniform init)
# ---------------------------------------------------------------------------
def make_params(key, d_model, nhead, dim_feedforward):
    ks = jax.random.split(key, 6)

    def lin(k, out_f, in_f):
        bound = 1.0 / math.sqrt(in_f)
        kw, kb = jax.random.split(k)
        w = jax.random.uniform(kw, (out_f, in_f), jnp.float32, -bound, bound)
        b = jax.random.uniform(kb, (out_f,), jnp.float32, -bound, bound)
        return w, b

    p = {}
    p["in_proj_w"], p["in_proj_b"] = lin(ks[0], 3 * d_model, d_model)
    p["out_proj_w"], p["out_proj_b"] = lin(ks[1], d_model, d_model)
    p["gate1_w"], p["gate1_b"] = lin(ks[2], d_model, 2 * d_model)
    p["gate2_w"], p["gate2_b"] = lin(ks[3], d_model, 2 * d_model)
    p["linear1_w"], p["linear1_b"] = lin(ks[4], dim_feedforward, d_model)
    p["linear2_w"], p["linear2_b"] = lin(ks[5], d_model, dim_feedforward)
    for name in ("norm1", "norm2", "norm3"):
        p[name + "_w"] = jnp.ones((d_model,), jnp.float32)
        p[name + "_b"] = jnp.zeros((d_model,), jnp.float32)
    return p


def _layer_norm(v, w, b, eps=1e-5):
    mu = jnp.mean(v, axis=-1, keepdims=True)
    var = jnp.mean((v - mu) ** 2, axis=-1, keepdims=True)
    return (v - mu) * jax.lax.rsqrt(var + eps) * w + b


# ---------------------------------------------------------------------------
# Pallas implementation
# ---------------------------------------------------------------------------
def gated_transformer_xl_layer(src, params, nhead, *,
                               batch_block=1,
                               compute_dtype=jnp.bfloat16):
    S, B, D = src.shape
    H = nhead
    hd = D // H
    FF = params["linear1_w"].shape[0]
    assert D % H == 0
    assert B % batch_block == 0, "batch must be divisible by batch_block"
    Bt = batch_block
    N = Bt * S                      # rows processed per grid step
    scale = 1.0 / math.sqrt(hd)
    cdt = compute_dtype
    f32 = jnp.float32

    def row(v):                     # 1-D params -> (1, K) f32 rows
        return v.reshape(1, -1).astype(f32)

    # ---- wrapper-side weight layout (free HBM plumbing, done once) ---------
    w_in = params["in_proj_w"].T.astype(cdt)                     # (D, 3D)
    b_in = row(params["in_proj_b"])                              # (1, 3D)
    w_o = params["out_proj_w"].T.reshape(H, hd, D).astype(cdt)   # (H, hd, D)
    b_o = row(params["out_proj_b"])                              # (1, D)
    g1T = params["gate1_w"].T                                    # (2D, D)
    w_g1x, w_g1y = g1T[:D].astype(cdt), g1T[D:].astype(cdt)      # (D, D) each
    b_g1 = row(params["gate1_b"])
    g2T = params["gate2_w"].T
    w_g2x, w_g2y = g2T[:D].astype(cdt), g2T[D:].astype(cdt)
    b_g2 = row(params["gate2_b"])
    w_1 = params["linear1_w"].T.astype(cdt)                      # (D, FF)
    b_1 = row(params["linear1_b"])
    w_2 = params["linear2_w"].T.astype(cdt)                      # (FF, D)
    b_2 = row(params["linear2_b"])

    weights = [
        row(params["norm1_w"]), row(params["norm1_b"]),
        w_in, b_in, w_o, b_o,
        w_g1x, w_g1y, b_g1,
        row(params["norm2_w"]), row(params["norm2_b"]),
        w_1, b_1, w_2, b_2,
        w_g2x, w_g2y, b_g2,
        row(params["norm3_w"]), row(params["norm3_b"]),
    ]

    def kernel(src_ref,
               ln1w, ln1b, win, bin_, wo, bo,
               g1x, g1y, bg1,
               ln2w, ln2b, w1, b1, w2, b2,
               g2x, g2y, bg2,
               ln3w, ln3b,
               out_ref):
        x = src_ref[...].reshape(N, D).astype(f32)               # (N, D)

        # ---- pre-norm multi-head self-attention --------------------------
        src2 = _layer_norm(x, ln1w[...], ln1b[...])
        qkv = jnp.dot(src2.astype(cdt), win[...],
                      preferred_element_type=f32) + bin_[...]    # (N, 3D)
        q, k, v = qkv[:, :D], qkv[:, D:2 * D], qkv[:, 2 * D:]

        def split_heads(t):          # (N, D) -> (Bt*H, S, hd), batch leading
            parts = []
            for b in range(Bt):
                tb = t[b * S:(b + 1) * S, :]
                for h in range(H):
                    parts.append(tb[:, h * hd:(h + 1) * hd])
            return jnp.stack(parts, axis=0)

        q3 = split_heads(q).astype(cdt)
        k3 = split_heads(k).astype(cdt)
        v3 = split_heads(v).astype(cdt)

        # batched over (batch_block * heads): one matmul pair, one softmax
        s = jnp.einsum("bqd,bkd->bqk", q3, k3,
                       preferred_element_type=f32) * scale       # (Bt*H,S,S)
        s = s - jnp.max(s, axis=-1, keepdims=True)
        p = jnp.exp(s)
        p = p * pl.reciprocal(jnp.sum(p, axis=-1, keepdims=True), approx=True)
        o3 = jnp.einsum("bqk,bkd->bqd", p.astype(cdt), v3,
                        preferred_element_type=f32)              # (Bt*H,S,hd)

        # output projection fused per head (no head concatenation)
        attn_rows = []
        for b in range(Bt):
            acc = jnp.zeros((S, D), f32)
            for h in range(H):
                acc = acc + jnp.dot(o3[b * H + h].astype(cdt), wo[h],
                                    preferred_element_type=f32)
            attn_rows.append(acc)
        attn = jnp.concatenate(attn_rows, axis=0) + bo[...]      # (N, D)

        # ---- gate 1 + residual (dropout1 = identity), split matmul --------
        g1 = (jnp.dot(x.astype(cdt), g1x[...], preferred_element_type=f32)
              + jnp.dot(attn.astype(cdt), g1y[...], preferred_element_type=f32)
              + bg1[...])
        x = x + g1

        # ---- pre-norm feed-forward ----------------------------------------
        src2 = _layer_norm(x, ln2w[...], ln2b[...])
        h1 = jnp.maximum(
            jnp.dot(src2.astype(cdt), w1[...], preferred_element_type=f32)
            + b1[...], 0.0)
        ffn = jnp.dot(h1.astype(cdt), w2[...],
                      preferred_element_type=f32) + b2[...]

        # ---- gate 2 + residual (dropout2 = identity), split matmul ---------
        g2 = (jnp.dot(x.astype(cdt), g2x[...], preferred_element_type=f32)
              + jnp.dot(ffn.astype(cdt), g2y[...], preferred_element_type=f32)
              + bg2[...])
        x = x + g2

        y = _layer_norm(x, ln3w[...], ln3b[...])
        out_ref[...] = y.reshape(out_ref.shape).astype(out_ref.dtype)

    x_bsd = jnp.transpose(src, (1, 0, 2))                        # (B, S, D)

    # squeeze the unit batch dim when processing one batch item per step
    io_block = (None, S, D) if Bt == 1 else (Bt, S, D)
    io_map = lambda b: (b, 0, 0)

    in_specs = [pl.BlockSpec(io_block, io_map)]
    for w in weights:
        in_specs.append(pl.BlockSpec(w.shape, lambda b, _n=w.ndim: (0,) * _n))

    # advisory cost estimate for the surrounding XLA schedule
    flops = int(
        2 * B * S * D * 3 * D              # qkv projection
        + 2 * 2 * B * S * S * D            # q@k^T and p@v over all heads
        + 2 * B * S * D * D                # output projection
        + 2 * 2 * B * S * 2 * D * D        # two gates, each (2D)->D
        + 2 * 2 * B * S * D * FF)          # ffn up + down
    transcendentals = int(B * H * S * S + B * S)
    bytes_accessed = int(
        2 * x_bsd.size * x_bsd.dtype.itemsize
        + sum(w.size * w.dtype.itemsize for w in weights))

    out = pl.pallas_call(
        kernel,
        out_shape=jax.ShapeDtypeStruct((B, S, D), src.dtype),
        grid_spec=pltpu.PrefetchScalarGridSpec(
            num_scalar_prefetch=0,
            grid=(B // Bt,),
            in_specs=in_specs,
            out_specs=pl.BlockSpec(io_block, io_map),
        ),
        compiler_params=pltpu.CompilerParams(
            dimension_semantics=("parallel",),     # megacore sharding on v7x
            vmem_limit_bytes=32 * 1024 * 1024,
        ),
        cost_estimate=pl.CostEstimate(
            flops=flops, transcendentals=transcendentals,
            bytes_accessed=bytes_accessed),
    )(x_bsd, *weights)

    return jnp.transpose(out, (1, 0, 2))                         # (S, B, D)


# ---------------------------------------------------------------------------
# pure-JAX reference (mirrors the PyTorch forward, eval mode, f32)
# ---------------------------------------------------------------------------
def reference(src, params, nhead):
    S, B, D = src.shape
    H = nhead
    hd = D // H

    def ln(v, w, b, eps=1e-5):
        mu = v.mean(-1, keepdims=True)
        var = ((v - mu) ** 2).mean(-1, keepdims=True)
        return (v - mu) / jnp.sqrt(var + eps) * w + b

    x = src
    src2 = ln(x, params["norm1_w"], params["norm1_b"])
    qkv = src2 @ params["in_proj_w"].T + params["in_proj_b"]
    q, k, v = jnp.split(qkv, 3, axis=-1)

    def to_heads(t):
        return t.reshape(S, B, H, hd).transpose(1, 2, 0, 3)      # (B,H,S,hd)

    qh, kh, vh = to_heads(q), to_heads(k), to_heads(v)
    s = jnp.einsum("bhqd,bhkd->bhqk", qh, kh) / math.sqrt(hd)
    p = jax.nn.softmax(s, axis=-1)
    a = jnp.einsum("bhqk,bhkd->bhqd", p, vh)
    a = a.transpose(2, 0, 1, 3).reshape(S, B, D)
    attn = a @ params["out_proj_w"].T + params["out_proj_b"]

    g1 = jnp.concatenate([x, attn], -1) @ params["gate1_w"].T + params["gate1_b"]
    x = x + g1
    src2 = ln(x, params["norm2_w"], params["norm2_b"])
    ffn = (jnp.maximum(src2 @ params["linear1_w"].T + params["linear1_b"], 0.0)
           @ params["linear2_w"].T + params["linear2_b"])
    g2 = jnp.concatenate([x, ffn], -1) @ params["gate2_w"].T + params["gate2_b"]
    x = x + g2
    return ln(x, params["norm3_w"], params["norm3_b"])


if __name__ == "__main__":
    S, B, D, H, FF = 8, 2, 32, 4, 64
    key = jax.random.PRNGKey(0)
    k_src, k_par = jax.random.split(key)

    src = jax.random.normal(k_src, (S, B, D), jnp.float32)
    params = make_params(k_par, D, H, FF)

    out = gated_transformer_xl_layer(src, params, H, batch_block=1)
    out = jax.block_until_ready(out)

    ref = reference(src, params, H)
    assert out.shape == (S, B, D)
    err = float(jnp.max(jnp.abs(out - ref)))
    # bf16 MXU operands with f32 accumulation -> loosened tolerance vs f32 ref
    assert jnp.allclose(out, ref, atol=5e-2, rtol=5e-2), f"max abs err {err}"
    print("KERNEL_OK")
</pallas_src>

<mosaic_0001>
module attributes {stable_mosaic.version = 11 : i64} {
  func.func @kernel(%arg0: i32, %arg1: memref<1x8x32xf32, #tpu.memory_space<vmem>>, %arg2: memref<1x32xf32, #tpu.memory_space<vmem>>, %arg3: memref<1x32xf32, #tpu.memory_space<vmem>>, %arg4: memref<32x96xbf16, #tpu.memory_space<vmem>>, %arg5: memref<1x96xf32, #tpu.memory_space<vmem>>, %arg6: memref<4x8x32xbf16, #tpu.memory_space<vmem>>, %arg7: memref<1x32xf32, #tpu.memory_space<vmem>>, %arg8: memref<32x32xbf16, #tpu.memory_space<vmem>>, %arg9: memref<32x32xbf16, #tpu.memory_space<vmem>>, %arg10: memref<1x32xf32, #tpu.memory_space<vmem>>, %arg11: memref<1x32xf32, #tpu.memory_space<vmem>>, %arg12: memref<1x32xf32, #tpu.memory_space<vmem>>, %arg13: memref<32x64xbf16, #tpu.memory_space<vmem>>, %arg14: memref<1x64xf32, #tpu.memory_space<vmem>>, %arg15: memref<64x32xbf16, #tpu.memory_space<vmem>>, %arg16: memref<1x32xf32, #tpu.memory_space<vmem>>, %arg17: memref<32x32xbf16, #tpu.memory_space<vmem>>, %arg18: memref<32x32xbf16, #tpu.memory_space<vmem>>, %arg19: memref<1x32xf32, #tpu.memory_space<vmem>>, %arg20: memref<1x32xf32, #tpu.memory_space<vmem>>, %arg21: memref<1x32xf32, #tpu.memory_space<vmem>>, %arg22: memref<1x8x32xf32, #tpu.memory_space<vmem>>) attributes {dimension_semantics = [#tpu.dimension_semantics<parallel>], iteration_bounds = array<i64: 2>, scalar_prefetch = 0 : i64, scratch_operands = 0 : i64, tpu.core_type = #tpu.core_type<tc>, window_params = [{transform_indices = @transform_0, window_bounds = array<i64: 1, 8, 32>}, {pipeline_mode = #tpu.pipeline_mode<synchronous>, transform_indices = @transform_1, window_bounds = array<i64: 1, 32>}, {pipeline_mode = #tpu.pipeline_mode<synchronous>, transform_indices = @transform_2, window_bounds = array<i64: 1, 32>}, {pipeline_mode = #tpu.pipeline_mode<synchronous>, transform_indices = @transform_3, window_bounds = array<i64: 32, 96>}, {pipeline_mode = #tpu.pipeline_mode<synchronous>, transform_indices = @transform_4, window_bounds = array<i64: 1, 96>}, {pipeline_mode = #tpu.pipeline_mode<synchronous>, transform_indices = @transform_5, window_bounds = array<i64: 4, 8, 32>}, {pipeline_mode = #tpu.pipeline_mode<synchronous>, transform_indices = @transform_6, window_bounds = array<i64: 1, 32>}, {pipeline_mode = #tpu.pipeline_mode<synchronous>, transform_indices = @transform_7, window_bounds = array<i64: 32, 32>}, {pipeline_mode = #tpu.pipeline_mode<synchronous>, transform_indices = @transform_8, window_bounds = array<i64: 32, 32>}, {pipeline_mode = #tpu.pipeline_mode<synchronous>, transform_indices = @transform_9, window_bounds = array<i64: 1, 32>}, {pipeline_mode = #tpu.pipeline_mode<synchronous>, transform_indices = @transform_10, window_bounds = array<i64: 1, 32>}, {pipeline_mode = #tpu.pipeline_mode<synchronous>, transform_indices = @transform_11, window_bounds = array<i64: 1, 32>}, {pipeline_mode = #tpu.pipeline_mode<synchronous>, transform_indices = @transform_12, window_bounds = array<i64: 32, 64>}, {pipeline_mode = #tpu.pipeline_mode<synchronous>, transform_indices = @transform_13, window_bounds = array<i64: 1, 64>}, {pipeline_mode = #tpu.pipeline_mode<synchronous>, transform_indices = @transform_14, window_bounds = array<i64: 64, 32>}, {pipeline_mode = #tpu.pipeline_mode<synchronous>, transform_indices = @transform_15, window_bounds = array<i64: 1, 32>}, {pipeline_mode = #tpu.pipeline_mode<synchronous>, transform_indices = @transform_16, window_bounds = array<i64: 32, 32>}, {pipeline_mode = #tpu.pipeline_mode<synchronous>, transform_indices = @transform_17, window_bounds = array<i64: 32, 32>}, {pipeline_mode = #tpu.pipeline_mode<synchronous>, transform_indices = @transform_18, window_bounds = array<i64: 1, 32>}, {pipeline_mode = #tpu.pipeline_mode<synchronous>, transform_indices = @transform_19, window_bounds = array<i64: 1, 32>}, {pipeline_mode = #tpu.pipeline_mode<synchronous>, transform_indices = @transform_20, window_bounds = array<i64: 1, 32>}, {transform_indices = @transform_21, window_bounds = array<i64: 1, 8, 32>}]} {
    %c0 = arith.constant 0 : index
    %c0_0 = arith.constant 0 : index
    %c0_1 = arith.constant 0 : index
    %0 = vector.load %arg1[%c0, %c0_0, %c0_1] : memref<1x8x32xf32, #tpu.memory_space<vmem>>, vector<1x8x32xf32>
    %1 = vector.shape_cast %0 : vector<1x8x32xf32> to vector<8x32xf32>
    %c0_2 = arith.constant 0 : index
    %c0_3 = arith.constant 0 : index
    %2 = vector.load %arg2[%c0_2, %c0_3] : memref<1x32xf32, #tpu.memory_space<vmem>>, vector<1x32xf32>
    %c0_4 = arith.constant 0 : index
    %c0_5 = arith.constant 0 : index
    %3 = vector.load %arg3[%c0_4, %c0_5] : memref<1x32xf32, #tpu.memory_space<vmem>>, vector<1x32xf32>
    %cst = arith.constant dense<0.000000e+00> : vector<8xf32>
    %4 = vector.multi_reduction <add>, %1, %cst [1] : vector<8x32xf32> to vector<8xf32>
    %5 = vector.shape_cast %4 : vector<8xf32> to vector<8x1xf32>
    %cst_6 = arith.constant 3.200000e+01 : f32
    %6 = vector.broadcast %cst_6 : f32 to vector<8x1xf32>
    %7 = arith.divf %5, %6 : vector<8x1xf32>
    %8 = vector.broadcast %7 : vector<8x1xf32> to vector<8x32xf32>
    %9 = arith.subf %1, %8 : vector<8x32xf32>
    %10 = arith.mulf %9, %9 : vector<8x32xf32>
    %cst_7 = arith.constant dense<0.000000e+00> : vector<8xf32>
    %11 = vector.multi_reduction <add>, %10, %cst_7 [1] : vector<8x32xf32> to vector<8xf32>
    %12 = vector.shape_cast %11 : vector<8xf32> to vector<8x1xf32>
    %cst_8 = arith.constant 3.200000e+01 : f32
    %13 = vector.broadcast %cst_8 : f32 to vector<8x1xf32>
    %14 = arith.divf %12, %13 : vector<8x1xf32>
    %15 = vector.broadcast %7 : vector<8x1xf32> to vector<8x32xf32>
    %16 = arith.subf %1, %15 : vector<8x32xf32>
    %cst_9 = arith.constant 9.99999974E-6 : f32
    %17 = vector.broadcast %cst_9 : f32 to vector<8x1xf32>
    %18 = arith.addf %14, %17 : vector<8x1xf32>
    %19 = math.rsqrt %18 : vector<8x1xf32>
    %20 = vector.broadcast %19 : vector<8x1xf32> to vector<8x32xf32>
    %21 = arith.mulf %16, %20 : vector<8x32xf32>
    %22 = vector.broadcast %2 : vector<1x32xf32> to vector<8x32xf32>
    %23 = arith.mulf %21, %22 : vector<8x32xf32>
    %24 = vector.broadcast %3 : vector<1x32xf32> to vector<8x32xf32>
    %25 = arith.addf %23, %24 : vector<8x32xf32>
    %26 = arith.truncf %25 : vector<8x32xf32> to vector<8x32xbf16>
    %c0_10 = arith.constant 0 : index
    %c0_11 = arith.constant 0 : index
    %27 = vector.load %arg4[%c0_10, %c0_11] : memref<32x96xbf16, #tpu.memory_space<vmem>>, vector<32x96xbf16>
    %cst_12 = arith.constant dense<0.000000e+00> : vector<8x96xf32>
    %28 = tpu.matmul %26, %27, %cst_12 {dimension_numbers = #tpu.dot_dimension_numbers<[1], [0], [0], [1], [0, 0, 1, 1], [], []>} : vector<8x32xbf16>, vector<32x96xbf16>, vector<8x96xf32> -> vector<8x96xf32>
    %c0_13 = arith.constant 0 : index
    %c0_14 = arith.constant 0 : index
    %29 = vector.load %arg5[%c0_13, %c0_14] : memref<1x96xf32, #tpu.memory_space<vmem>>, vector<1x96xf32>
    %30 = vector.broadcast %29 : vector<1x96xf32> to vector<8x96xf32>
    %31 = arith.addf %28, %30 : vector<8x96xf32>
    %32 = vector.extract_strided_slice %31 {offsets = [0, 0], sizes = [8, 32], strides = [1, 1]} : vector<8x96xf32> to vector<8x32xf32>
    %33 = vector.extract_strided_slice %31 {offsets = [0, 32], sizes = [8, 32], strides = [1, 1]} : vector<8x96xf32> to vector<8x32xf32>
    %34 = vector.extract_strided_slice %31 {offsets = [0, 64], sizes = [8, 32], strides = [1, 1]} : vector<8x96xf32> to vector<8x32xf32>
    %35 = vector.extract_strided_slice %32 {offsets = [0, 0], sizes = [8, 8], strides = [1, 1]} : vector<8x32xf32> to vector<8x8xf32>
    %36 = vector.extract_strided_slice %32 {offsets = [0, 8], sizes = [8, 8], strides = [1, 1]} : vector<8x32xf32> to vector<8x8xf32>
    %37 = vector.extract_strided_slice %32 {offsets = [0, 16], sizes = [8, 8], strides = [1, 1]} : vector<8x32xf32> to vector<8x8xf32>
    %38 = vector.extract_strided_slice %32 {offsets = [0, 24], sizes = [8, 8], strides = [1, 1]} : vector<8x32xf32> to vector<8x8xf32>
    %39 = vector.shape_cast %35 : vector<8x8xf32> to vector<1x8x8xf32>
    %40 = vector.shape_cast %36 : vector<8x8xf32> to vector<1x8x8xf32>
    %41 = vector.shape_cast %37 : vector<8x8xf32> to vector<1x8x8xf32>
    %42 = vector.shape_cast %38 : vector<8x8xf32> to vector<1x8x8xf32>
    %43 = tpu.concatenate %39, %40, %41, %42 in 0 : vector<1x8x8xf32>, vector<1x8x8xf32>, vector<1x8x8xf32>, vector<1x8x8xf32> -> vector<4x8x8xf32>
    %44 = arith.truncf %43 : vector<4x8x8xf32> to vector<4x8x8xbf16>
    %45 = vector.extract_strided_slice %33 {offsets = [0, 0], sizes = [8, 8], strides = [1, 1]} : vector<8x32xf32> to vector<8x8xf32>
    %46 = vector.extract_strided_slice %33 {offsets = [0, 8], sizes = [8, 8], strides = [1, 1]} : vector<8x32xf32> to vector<8x8xf32>
    %47 = vector.extract_strided_slice %33 {offsets = [0, 16], sizes = [8, 8], strides = [1, 1]} : vector<8x32xf32> to vector<8x8xf32>
    %48 = vector.extract_strided_slice %33 {offsets = [0, 24], sizes = [8, 8], strides = [1, 1]} : vector<8x32xf32> to vector<8x8xf32>
    %49 = vector.shape_cast %45 : vector<8x8xf32> to vector<1x8x8xf32>
    %50 = vector.shape_cast %46 : vector<8x8xf32> to vector<1x8x8xf32>
    %51 = vector.shape_cast %47 : vector<8x8xf32> to vector<1x8x8xf32>
    %52 = vector.shape_cast %48 : vector<8x8xf32> to vector<1x8x8xf32>
    %53 = tpu.concatenate %49, %50, %51, %52 in 0 : vector<1x8x8xf32>, vector<1x8x8xf32>, vector<1x8x8xf32>, vector<1x8x8xf32> -> vector<4x8x8xf32>
    %54 = arith.truncf %53 : vector<4x8x8xf32> to vector<4x8x8xbf16>
    %55 = vector.extract_strided_slice %34 {offsets = [0, 0], sizes = [8, 8], strides = [1, 1]} : vector<8x32xf32> to vector<8x8xf32>
    %56 = vector.extract_strided_slice %34 {offsets = [0, 8], sizes = [8, 8], strides = [1, 1]} : vector<8x32xf32> to vector<8x8xf32>
    %57 = vector.extract_strided_slice %34 {offsets = [0, 16], sizes = [8, 8], strides = [1, 1]} : vector<8x32xf32> to vector<8x8xf32>
    %58 = vector.extract_strided_slice %34 {offsets = [0, 24], sizes = [8, 8], strides = [1, 1]} : vector<8x32xf32> to vector<8x8xf32>
    %59 = vector.shape_cast %55 : vector<8x8xf32> to vector<1x8x8xf32>
    %60 = vector.shape_cast %56 : vector<8x8xf32> to vector<1x8x8xf32>
    %61 = vector.shape_cast %57 : vector<8x8xf32> to vector<1x8x8xf32>
    %62 = vector.shape_cast %58 : vector<8x8xf32> to vector<1x8x8xf32>
    %63 = tpu.concatenate %59, %60, %61, %62 in 0 : vector<1x8x8xf32>, vector<1x8x8xf32>, vector<1x8x8xf32>, vector<1x8x8xf32> -> vector<4x8x8xf32>
    %64 = arith.truncf %63 : vector<4x8x8xf32> to vector<4x8x8xbf16>
    "tpu.trace_start"() <{level = 10 : i32, message = "bqd,bkd->bqk"}> : () -> ()
    %cst_15 = arith.constant dense<0.000000e+00> : vector<4x8x8xf32>
    %65 = tpu.matmul %44, %54, %cst_15 {dimension_numbers = #tpu.dot_dimension_numbers<[2], [2], [1], [1], [0, 0, 0, 1, 1, 1], [0], [0]>} : vector<4x8x8xbf16>, vector<4x8x8xbf16>, vector<4x8x8xf32> -> vector<4x8x8xf32>
    "tpu.trace_stop"() : () -> ()
    %cst_16 = arith.constant 0.353553385 : f32
    %66 = vector.broadcast %cst_16 : f32 to vector<4x8x8xf32>
    %67 = arith.mulf %65, %66 : vector<4x8x8xf32>
    %cst_17 = arith.constant dense<0xFF800000> : vector<4x8xf32>
    %68 = vector.multi_reduction <maximumf>, %67, %cst_17 [2] : vector<4x8x8xf32> to vector<4x8xf32>
    %69 = vector.shape_cast %68 : vector<4x8xf32> to vector<4x8x1xf32>
    %70 = vector.broadcast %69 : vector<4x8x1xf32> to vector<4x8x8xf32>
    %71 = arith.subf %67, %70 : vector<4x8x8xf32>
    %72 = math.exp %71 : vector<4x8x8xf32>
    %cst_18 = arith.constant dense<0.000000e+00> : vector<4x8xf32>
    %73 = vector.multi_reduction <add>, %72, %cst_18 [2] : vector<4x8x8xf32> to vector<4x8xf32>
    %74 = vector.shape_cast %73 : vector<4x8xf32> to vector<4x8x1xf32>
    %75 = tpu.reciprocal %74 {approx = true} : vector<4x8x1xf32> -> vector<4x8x1xf32>
    %76 = vector.broadcast %75 : vector<4x8x1xf32> to vector<4x8x8xf32>
    %77 = arith.mulf %72, %76 : vector<4x8x8xf32>
    %78 = arith.truncf %77 : vector<4x8x8xf32> to vector<4x8x8xbf16>
    "tpu.trace_start"() <{level = 10 : i32, message = "bqk,bkd->bqd"}> : () -> ()
    %cst_19 = arith.constant dense<0.000000e+00> : vector<4x8x8xf32>
    %79 = tpu.matmul %78, %64, %cst_19 {dimension_numbers = #tpu.dot_dimension_numbers<[2], [1], [1], [2], [0, 0, 0, 1, 1, 2], [0], [0]>} : vector<4x8x8xbf16>, vector<4x8x8xbf16>, vector<4x8x8xf32> -> vector<4x8x8xf32>
    %cst_20 = arith.constant 0.000000e+00 : f32
    "tpu.trace_stop"() : () -> ()
    %80 = vector.broadcast %cst_20 : f32 to vector<8x32xf32>
    %81 = vector.extract_strided_slice %79 {offsets = [0, 0, 0], sizes = [1, 8, 8], strides = [1, 1, 1]} : vector<4x8x8xf32> to vector<1x8x8xf32>
    %82 = vector.shape_cast %81 : vector<1x8x8xf32> to vector<8x8xf32>
    %83 = arith.truncf %82 : vector<8x8xf32> to vector<8x8xbf16>
    %c0_21 = arith.constant 0 : index
    %c0_22 = arith.constant 0 : index
    %c0_23 = arith.constant 0 : index
    %84 = vector.load %arg6[%c0_21, %c0_22, %c0_23] : memref<4x8x32xbf16, #tpu.memory_space<vmem>>, vector<1x8x32xbf16>
    %85 = vector.shape_cast %84 : vector<1x8x32xbf16> to vector<8x32xbf16>
    %cst_24 = arith.constant dense<0.000000e+00> : vector<8x32xf32>
    %86 = tpu.matmul %83, %85, %cst_24 {dimension_numbers = #tpu.dot_dimension_numbers<[1], [0], [0], [1], [0, 0, 1, 1], [], []>} : vector<8x8xbf16>, vector<8x32xbf16>, vector<8x32xf32> -> vector<8x32xf32>
    %87 = arith.addf %80, %86 : vector<8x32xf32>
    %88 = vector.extract_strided_slice %79 {offsets = [1, 0, 0], sizes = [1, 8, 8], strides = [1, 1, 1]} : vector<4x8x8xf32> to vector<1x8x8xf32>
    %89 = vector.shape_cast %88 : vector<1x8x8xf32> to vector<8x8xf32>
    %90 = arith.truncf %89 : vector<8x8xf32> to vector<8x8xbf16>
    %c1 = arith.constant 1 : index
    %c0_25 = arith.constant 0 : index
    %c0_26 = arith.constant 0 : index
    %91 = vector.load %arg6[%c1, %c0_25, %c0_26] : memref<4x8x32xbf16, #tpu.memory_space<vmem>>, vector<1x8x32xbf16>
    %92 = vector.shape_cast %91 : vector<1x8x32xbf16> to vector<8x32xbf16>
    %cst_27 = arith.constant dense<0.000000e+00> : vector<8x32xf32>
    %93 = tpu.matmul %90, %92, %cst_27 {dimension_numbers = #tpu.dot_dimension_numbers<[1], [0], [0], [1], [0, 0, 1, 1], [], []>} : vector<8x8xbf16>, vector<8x32xbf16>, vector<8x32xf32> -> vector<8x32xf32>
    %94 = arith.addf %87, %93 : vector<8x32xf32>
    %95 = vector.extract_strided_slice %79 {offsets = [2, 0, 0], sizes = [1, 8, 8], strides = [1, 1, 1]} : vector<4x8x8xf32> to vector<1x8x8xf32>
    %96 = vector.shape_cast %95 : vector<1x8x8xf32> to vector<8x8xf32>
    %97 = arith.truncf %96 : vector<8x8xf32> to vector<8x8xbf16>
    %c2 = arith.constant 2 : index
    %c0_28 = arith.constant 0 : index
    %c0_29 = arith.constant 0 : index
    %98 = vector.load %arg6[%c2, %c0_28, %c0_29] : memref<4x8x32xbf16, #tpu.memory_space<vmem>>, vector<1x8x32xbf16>
    %99 = vector.shape_cast %98 : vector<1x8x32xbf16> to vector<8x32xbf16>
    %cst_30 = arith.constant dense<0.000000e+00> : vector<8x32xf32>
    %100 = tpu.matmul %97, %99, %cst_30 {dimension_numbers = #tpu.dot_dimension_numbers<[1], [0], [0], [1], [0, 0, 1, 1], [], []>} : vector<8x8xbf16>, vector<8x32xbf16>, vector<8x32xf32> -> vector<8x32xf32>
    %101 = arith.addf %94, %100 : vector<8x32xf32>
    %102 = vector.extract_strided_slice %79 {offsets = [3, 0, 0], sizes = [1, 8, 8], strides = [1, 1, 1]} : vector<4x8x8xf32> to vector<1x8x8xf32>
    %103 = vector.shape_cast %102 : vector<1x8x8xf32> to vector<8x8xf32>
    %104 = arith.truncf %103 : vector<8x8xf32> to vector<8x8xbf16>
    %c3 = arith.constant 3 : index
    %c0_31 = arith.constant 0 : index
    %c0_32 = arith.constant 0 : index
    %105 = vector.load %arg6[%c3, %c0_31, %c0_32] : memref<4x8x32xbf16, #tpu.memory_space<vmem>>, vector<1x8x32xbf16>
    %106 = vector.shape_cast %105 : vector<1x8x32xbf16> to vector<8x32xbf16>
    %cst_33 = arith.constant dense<0.000000e+00> : vector<8x32xf32>
    %107 = tpu.matmul %104, %106, %cst_33 {dimension_numbers = #tpu.dot_dimension_numbers<[1], [0], [0], [1], [0, 0, 1, 1], [], []>} : vector<8x8xbf16>, vector<8x32xbf16>, vector<8x32xf32> -> vector<8x32xf32>
    %108 = arith.addf %101, %107 : vector<8x32xf32>
    %c0_34 = arith.constant 0 : index
    %c0_35 = arith.constant 0 : index
    %109 = vector.load %arg7[%c0_34, %c0_35] : memref<1x32xf32, #tpu.memory_space<vmem>>, vector<1x32xf32>
    %110 = vector.broadcast %109 : vector<1x32xf32> to vector<8x32xf32>
    %111 = arith.addf %108, %110 : vector<8x32xf32>
    %112 = arith.truncf %1 : vector<8x32xf32> to vector<8x32xbf16>
    %c0_36 = arith.constant 0 : index
    %c0_37 = arith.constant 0 : index
    %113 = vector.load %arg8[%c0_36, %c0_37] : memref<32x32xbf16, #tpu.memory_space<vmem>>, vector<32x32xbf16>
    %cst_38 = arith.constant dense<0.000000e+00> : vector<8x32xf32>
    %114 = tpu.matmul %112, %113, %cst_38 {dimension_numbers = #tpu.dot_dimension_numbers<[1], [0], [0], [1], [0, 0, 1, 1], [], []>} : vector<8x32xbf16>, vector<32x32xbf16>, vector<8x32xf32> -> vector<8x32xf32>
    %115 = arith.truncf %111 : vector<8x32xf32> to vector<8x32xbf16>
    %c0_39 = arith.constant 0 : index
    %c0_40 = arith.constant 0 : index
    %116 = vector.load %arg9[%c0_39, %c0_40] : memref<32x32xbf16, #tpu.memory_space<vmem>>, vector<32x32xbf16>
    %cst_41 = arith.constant dense<0.000000e+00> : vector<8x32xf32>
    %117 = tpu.matmul %115, %116, %cst_41 {dimension_numbers = #tpu.dot_dimension_numbers<[1], [0], [0], [1], [0, 0, 1, 1], [], []>} : vector<8x32xbf16>, vector<32x32xbf16>, vector<8x32xf32> -> vector<8x32xf32>
    %118 = arith.addf %114, %117 : vector<8x32xf32>
    %c0_42 = arith.constant 0 : index
    %c0_43 = arith.constant 0 : index
    %119 = vector.load %arg10[%c0_42, %c0_43] : memref<1x32xf32, #tpu.memory_space<vmem>>, vector<1x32xf32>
    %120 = vector.broadcast %119 : vector<1x32xf32> to vector<8x32xf32>
    %121 = arith.addf %118, %120 : vector<8x32xf32>
    %122 = arith.addf %1, %121 : vector<8x32xf32>
    %c0_44 = arith.constant 0 : index
    %c0_45 = arith.constant 0 : index
    %123 = vector.load %arg11[%c0_44, %c0_45] : memref<1x32xf32, #tpu.memory_space<vmem>>, vector<1x32xf32>
    %c0_46 = arith.constant 0 : index
    %c0_47 = arith.constant 0 : index
    %124 = vector.load %arg12[%c0_46, %c0_47] : memref<1x32xf32, #tpu.memory_space<vmem>>, vector<1x32xf32>
    %cst_48 = arith.constant dense<0.000000e+00> : vector<8xf32>
    %125 = vector.multi_reduction <add>, %122, %cst_48 [1] : vector<8x32xf32> to vector<8xf32>
    %126 = vector.shape_cast %125 : vector<8xf32> to vector<8x1xf32>
    %cst_49 = arith.constant 3.200000e+01 : f32
    %127 = vector.broadcast %cst_49 : f32 to vector<8x1xf32>
    %128 = arith.divf %126, %127 : vector<8x1xf32>
    %129 = vector.broadcast %128 : vector<8x1xf32> to vector<8x32xf32>
    %130 = arith.subf %122, %129 : vector<8x32xf32>
    %131 = arith.mulf %130, %130 : vector<8x32xf32>
    %cst_50 = arith.constant dense<0.000000e+00> : vector<8xf32>
    %132 = vector.multi_reduction <add>, %131, %cst_50 [1] : vector<8x32xf32> to vector<8xf32>
    %133 = vector.shape_cast %132 : vector<8xf32> to vector<8x1xf32>
    %cst_51 = arith.constant 3.200000e+01 : f32
    %134 = vector.broadcast %cst_51 : f32 to vector<8x1xf32>
    %135 = arith.divf %133, %134 : vector<8x1xf32>
    %136 = vector.broadcast %128 : vector<8x1xf32> to vector<8x32xf32>
    %137 = arith.subf %122, %136 : vector<8x32xf32>
    %cst_52 = arith.constant 9.99999974E-6 : f32
    %138 = vector.broadcast %cst_52 : f32 to vector<8x1xf32>
    %139 = arith.addf %135, %138 : vector<8x1xf32>
    %140 = math.rsqrt %139 : vector<8x1xf32>
    %141 = vector.broadcast %140 : vector<8x1xf32> to vector<8x32xf32>
    %142 = arith.mulf %137, %141 : vector<8x32xf32>
    %143 = vector.broadcast %123 : vector<1x32xf32> to vector<8x32xf32>
    %144 = arith.mulf %142, %143 : vector<8x32xf32>
    %145 = vector.broadcast %124 : vector<1x32xf32> to vector<8x32xf32>
    %146 = arith.addf %144, %145 : vector<8x32xf32>
    %147 = arith.truncf %146 : vector<8x32xf32> to vector<8x32xbf16>
    %c0_53 = arith.constant 0 : index
    %c0_54 = arith.constant 0 : index
    %148 = vector.load %arg13[%c0_53, %c0_54] : memref<32x64xbf16, #tpu.memory_space<vmem>>, vector<32x64xbf16>
    %cst_55 = arith.constant dense<0.000000e+00> : vector<8x64xf32>
    %149 = tpu.matmul %147, %148, %cst_55 {dimension_numbers = #tpu.dot_dimension_numbers<[1], [0], [0], [1], [0, 0, 1, 1], [], []>} : vector<8x32xbf16>, vector<32x64xbf16>, vector<8x64xf32> -> vector<8x64xf32>
    %c0_56 = arith.constant 0 : index
    %c0_57 = arith.constant 0 : index
    %150 = vector.load %arg14[%c0_56, %c0_57] : memref<1x64xf32, #tpu.memory_space<vmem>>, vector<1x64xf32>
    %151 = vector.broadcast %150 : vector<1x64xf32> to vector<8x64xf32>
    %152 = arith.addf %149, %151 : vector<8x64xf32>
    %cst_58 = arith.constant 0.000000e+00 : f32
    %153 = vector.broadcast %cst_58 : f32 to vector<8x64xf32>
    %154 = arith.maximumf %152, %153 : vector<8x64xf32>
    %155 = arith.truncf %154 : vector<8x64xf32> to vector<8x64xbf16>
    %c0_59 = arith.constant 0 : index
    %c0_60 = arith.constant 0 : index
    %156 = vector.load %arg15[%c0_59, %c0_60] : memref<64x32xbf16, #tpu.memory_space<vmem>>, vector<64x32xbf16>
    %cst_61 = arith.constant dense<0.000000e+00> : vector<8x32xf32>
    %157 = tpu.matmul %155, %156, %cst_61 {dimension_numbers = #tpu.dot_dimension_numbers<[1], [0], [0], [1], [0, 0, 1, 1], [], []>} : vector<8x64xbf16>, vector<64x32xbf16>, vector<8x32xf32> -> vector<8x32xf32>
    %c0_62 = arith.constant 0 : index
    %c0_63 = arith.constant 0 : index
    %158 = vector.load %arg16[%c0_62, %c0_63] : memref<1x32xf32, #tpu.memory_space<vmem>>, vector<1x32xf32>
    %159 = vector.broadcast %158 : vector<1x32xf32> to vector<8x32xf32>
    %160 = arith.addf %157, %159 : vector<8x32xf32>
    %161 = arith.truncf %122 : vector<8x32xf32> to vector<8x32xbf16>
    %c0_64 = arith.constant 0 : index
    %c0_65 = arith.constant 0 : index
    %162 = vector.load %arg17[%c0_64, %c0_65] : memref<32x32xbf16, #tpu.memory_space<vmem>>, vector<32x32xbf16>
    %cst_66 = arith.constant dense<0.000000e+00> : vector<8x32xf32>
    %163 = tpu.matmul %161, %162, %cst_66 {dimension_numbers = #tpu.dot_dimension_numbers<[1], [0], [0], [1], [0, 0, 1, 1], [], []>} : vector<8x32xbf16>, vector<32x32xbf16>, vector<8x32xf32> -> vector<8x32xf32>
    %164 = arith.truncf %160 : vector<8x32xf32> to vector<8x32xbf16>
    %c0_67 = arith.constant 0 : index
    %c0_68 = arith.constant 0 : index
    %165 = vector.load %arg18[%c0_67, %c0_68] : memref<32x32xbf16, #tpu.memory_space<vmem>>, vector<32x32xbf16>
    %cst_69 = arith.constant dense<0.000000e+00> : vector<8x32xf32>
    %166 = tpu.matmul %164, %165, %cst_69 {dimension_numbers = #tpu.dot_dimension_numbers<[1], [0], [0], [1], [0, 0, 1, 1], [], []>} : vector<8x32xbf16>, vector<32x32xbf16>, vector<8x32xf32> -> vector<8x32xf32>
    %167 = arith.addf %163, %166 : vector<8x32xf32>
    %c0_70 = arith.constant 0 : index
    %c0_71 = arith.constant 0 : index
    %168 = vector.load %arg19[%c0_70, %c0_71] : memref<1x32xf32, #tpu.memory_space<vmem>>, vector<1x32xf32>
    %169 = vector.broadcast %168 : vector<1x32xf32> to vector<8x32xf32>
    %170 = arith.addf %167, %169 : vector<8x32xf32>
    %171 = arith.addf %122, %170 : vector<8x32xf32>
    %c0_72 = arith.constant 0 : index
    %c0_73 = arith.constant 0 : index
    %172 = vector.load %arg20[%c0_72, %c0_73] : memref<1x32xf32, #tpu.memory_space<vmem>>, vector<1x32xf32>
    %c0_74 = arith.constant 0 : index
    %c0_75 = arith.constant 0 : index
    %173 = vector.load %arg21[%c0_74, %c0_75] : memref<1x32xf32, #tpu.memory_space<vmem>>, vector<1x32xf32>
    %cst_76 = arith.constant dense<0.000000e+00> : vector<8xf32>
    %174 = vector.multi_reduction <add>, %171, %cst_76 [1] : vector<8x32xf32> to vector<8xf32>
    %175 = vector.shape_cast %174 : vector<8xf32> to vector<8x1xf32>
    %cst_77 = arith.constant 3.200000e+01 : f32
    %176 = vector.broadcast %cst_77 : f32 to vector<8x1xf32>
    %177 = arith.divf %175, %176 : vector<8x1xf32>
    %178 = vector.broadcast %177 : vector<8x1xf32> to vector<8x32xf32>
    %179 = arith.subf %171, %178 : vector<8x32xf32>
    %180 = arith.mulf %179, %179 : vector<8x32xf32>
    %cst_78 = arith.constant dense<0.000000e+00> : vector<8xf32>
    %181 = vector.multi_reduction <add>, %180, %cst_78 [1] : vector<8x32xf32> to vector<8xf32>
    %182 = vector.shape_cast %181 : vector<8xf32> to vector<8x1xf32>
    %cst_79 = arith.constant 3.200000e+01 : f32
    %183 = vector.broadcast %cst_79 : f32 to vector<8x1xf32>
    %184 = arith.divf %182, %183 : vector<8x1xf32>
    %185 = vector.broadcast %177 : vector<8x1xf32> to vector<8x32xf32>
    %186 = arith.subf %171, %185 : vector<8x32xf32>
    %cst_80 = arith.constant 9.99999974E-6 : f32
    %187 = vector.broadcast %cst_80 : f32 to vector<8x1xf32>
    %188 = arith.addf %184, %187 : vector<8x1xf32>
    %189 = math.rsqrt %188 : vector<8x1xf32>
    %190 = vector.broadcast %189 : vector<8x1xf32> to vector<8x32xf32>
    %191 = arith.mulf %186, %190 : vector<8x32xf32>
    %192 = vector.broadcast %172 : vector<1x32xf32> to vector<8x32xf32>
    %193 = arith.mulf %191, %192 : vector<8x32xf32>
    %194 = vector.broadcast %173 : vector<1x32xf32> to vector<8x32xf32>
    %195 = arith.addf %193, %194 : vector<8x32xf32>
    %c0_81 = arith.constant 0 : index
    %c0_82 = arith.constant 0 : index
    %c0_83 = arith.constant 0 : index
    %196 = vector.load %arg22[%c0_81, %c0_82, %c0_83] : memref<1x8x32xf32, #tpu.memory_space<vmem>>, vector<1x8x32xf32>
    %197 = vector.shape_cast %196 : vector<1x8x32xf32> to vector<8x32xf32>
    %198 = vector.shape_cast %195 : vector<8x32xf32> to vector<1x8x32xf32>
    tpu.vector_store %arg22[%c0_81, %c0_82, %c0_83], %198 {strides = array<i32>} : memref<1x8x32xf32, #tpu.memory_space<vmem>>, vector<1x8x32xf32>,
    return
  }
  func.func @transform_0(%arg0: i32) -> (i32, i32, i32) {
    %c0_i32 = arith.constant 0 : i32
    %c0_i32_0 = arith.constant 0 : i32
    %c0_i32_1 = arith.constant 0 : i32
    return %arg0, %c0_i32, %c0_i32_0 : i32, i32, i32
  }
  func.func @transform_1(%arg0: i32) -> (i32, i32) {
    %c0_i32 = arith.constant 0 : i32
    %c0_i32_0 = arith.constant 0 : i32
    %c0_i32_1 = arith.constant 0 : i32
    return %c0_i32, %c0_i32_0 : i32, i32
  }
  func.func @transform_2(%arg0: i32) -> (i32, i32) {
    %c0_i32 = arith.constant 0 : i32
    %c0_i32_0 = arith.constant 0 : i32
    %c0_i32_1 = arith.constant 0 : i32
    return %c0_i32, %c0_i32_0 : i32, i32
  }
  func.func @transform_3(%arg0: i32) -> (i32, i32) {
    %c0_i32 = arith.constant 0 : i32
    %c0_i32_0 = arith.constant 0 : i32
    %c0_i32_1 = arith.constant 0 : i32
    return %c0_i32, %c0_i32_0 : i32, i32
  }
  func.func @transform_4(%arg0: i32) -> (i32, i32) {
    %c0_i32 = arith.constant 0 : i32
    %c0_i32_0 = arith.constant 0 : i32
    %c0_i32_1 = arith.constant 0 : i32
    return %c0_i32, %c0_i32_0 : i32, i32
  }
  func.func @transform_5(%arg0: i32) -> (i32, i32, i32) {
    %c0_i32 = arith.constant 0 : i32
    %c0_i32_0 = arith.constant 0 : i32
    %c0_i32_1 = arith.constant 0 : i32
    %c0_i32_2 = arith.constant 0 : i32
    return %c0_i32, %c0_i32_0, %c0_i32_1 : i32, i32, i32
  }
  func.func @transform_6(%arg0: i32) -> (i32, i32) {
    %c0_i32 = arith.constant 0 : i32
    %c0_i32_0 = arith.constant 0 : i32
    %c0_i32_1 = arith.constant 0 : i32
    return %c0_i32, %c0_i32_0 : i32, i32
  }
  func.func @transform_7(%arg0: i32) -> (i32, i32) {
    %c0_i32 = arith.constant 0 : i32
    %c0_i32_0 = arith.constant 0 : i32
    %c0_i32_1 = arith.constant 0 : i32
    return %c0_i32, %c0_i32_0 : i32, i32
  }
  func.func @transform_8(%arg0: i32) -> (i32, i32) {
    %c0_i32 = arith.constant 0 : i32
    %c0_i32_0 = arith.constant 0 : i32
    %c0_i32_1 = arith.constant 0 : i32
    return %c0_i32, %c0_i32_0 : i32, i32
  }
  func.func @transform_9(%arg0: i32) -> (i32, i32) {
    %c0_i32 = arith.constant 0 : i32
    %c0_i32_0 = arith.constant 0 : i32
    %c0_i32_1 = arith.constant 0 : i32
    return %c0_i32, %c0_i32_0 : i32, i32
  }
  func.func @transform_10(%arg0: i32) -> (i32, i32) {
    %c0_i32 = arith.constant 0 : i32
    %c0_i32_0 = arith.constant 0 : i32
    %c0_i32_1 = arith.constant 0 : i32
    return %c0_i32, %c0_i32_0 : i32, i32
  }
  func.func @transform_11(%arg0: i32) -> (i32, i32) {
    %c0_i32 = arith.constant 0 : i32
    %c0_i32_0 = arith.constant 0 : i32
    %c0_i32_1 = arith.constant 0 : i32
    return %c0_i32, %c0_i32_0 : i32, i32
  }
  func.func @transform_12(%arg0: i32) -> (i32, i32) {
    %c0_i32 = arith.constant 0 : i32
    %c0_i32_0 = arith.constant 0 : i32
    %c0_i32_1 = arith.constant 0 : i32
    return %c0_i32, %c0_i32_0 : i32, i32
  }
  func.func @transform_13(%arg0: i32) -> (i32, i32) {
    %c0_i32 = arith.constant 0 : i32
    %c0_i32_0 = arith.constant 0 : i32
    %c0_i32_1 = arith.constant 0 : i32
    return %c0_i32, %c0_i32_0 : i32, i32
  }
  func.func @transform_14(%arg0: i32) -> (i32, i32) {
    %c0_i32 = arith.constant 0 : i32
    %c0_i32_0 = arith.constant 0 : i32
    %c0_i32_1 = arith.constant 0 : i32
    return %c0_i32, %c0_i32_0 : i32, i32
  }
  func.func @transform_15(%arg0: i32) -> (i32, i32) {
    %c0_i32 = arith.constant 0 : i32
    %c0_i32_0 = arith.constant 0 : i32
    %c0_i32_1 = arith.constant 0 : i32
    return %c0_i32, %c0_i32_0 : i32, i32
  }
  func.func @transform_16(%arg0: i32) -> (i32, i32) {
    %c0_i32 = arith.constant 0 : i32
    %c0_i32_0 = arith.constant 0 : i32
    %c0_i32_1 = arith.constant 0 : i32
    return %c0_i32, %c0_i32_0 : i32, i32
  }
  func.func @transform_17(%arg0: i32) -> (i32, i32) {
    %c0_i32 = arith.constant 0 : i32
    %c0_i32_0 = arith.constant 0 : i32
    %c0_i32_1 = arith.constant 0 : i32
    return %c0_i32, %c0_i32_0 : i32, i32
  }
  func.func @transform_18(%arg0: i32) -> (i32, i32) {
    %c0_i32 = arith.constant 0 : i32
    %c0_i32_0 = arith.constant 0 : i32
    %c0_i32_1 = arith.constant 0 : i32
    return %c0_i32, %c0_i32_0 : i32, i32
  }
  func.func @transform_19(%arg0: i32) -> (i32, i32) {
    %c0_i32 = arith.constant 0 : i32
    %c0_i32_0 = arith.constant 0 : i32
    %c0_i32_1 = arith.constant 0 : i32
    return %c0_i32, %c0_i32_0 : i32, i32
  }
  func.func @transform_20(%arg0: i32) -> (i32, i32) {
    %c0_i32 = arith.constant 0 : i32
    %c0_i32_0 = arith.constant 0 : i32
    %c0_i32_1 = arith.constant 0 : i32
    return %c0_i32, %c0_i32_0 : i32, i32
  }
  func.func @transform_21(%arg0: i32) -> (i32, i32, i32) {
    %c0_i32 = arith.constant 0 : i32
    %c0_i32_0 = arith.constant 0 : i32
    %c0_i32_1 = arith.constant 0 : i32
    return %arg0, %c0_i32, %c0_i32_0 : i32, i32, i32
  }
}

</mosaic_0001>

<llo_original>
// kernel: tpu_custom_call.1
$region0: #{tpu_custom_call.1}
  #allocation0 [shape = 'u32[]', space=smem, size = 0x4, offset = 0x4, fixed_abs, tag = 'smem constant byte address 0x4 - core index']
  #allocation1 [shape = 'u32[144,128]{1,0:T(1,128)}', space=vmem, size = 0x12000, scoped, tag = 'internal scratch']
  %s0 = inlined_call_operand.vmem [shape: f32[2,8,32], index: 0, kind: input, shape index: {}]
  %s1 = inlined_call_operand.hbm [shape: f32[1,32], index: 1, kind: input, shape index: {}]
  %s2 = inlined_call_operand.hbm [shape: f32[1,32], index: 2, kind: input, shape index: {}]
  %s3 = inlined_call_operand.vmem [shape: bf16[32,96], index: 3, kind: input, shape index: {}]
  %s4 = inlined_call_operand.hbm [shape: f32[1,96], index: 4, kind: input, shape index: {}]
  %s5 = inlined_call_operand.vmem [shape: bf16[4,8,32], index: 5, kind: input, shape index: {}]
  %s6 = inlined_call_operand.hbm [shape: f32[1,32], index: 6, kind: input, shape index: {}]
  %s7 = inlined_call_operand.hbm [shape: bf16[32,32], index: 7, kind: input, shape index: {}]
  %s8 = inlined_call_operand.hbm [shape: bf16[32,32], index: 8, kind: input, shape index: {}]
  %s9 = inlined_call_operand.hbm [shape: f32[1,32], index: 9, kind: input, shape index: {}]
  %s10 = inlined_call_operand.hbm [shape: f32[1,32], index: 10, kind: input, shape index: {}]
  %s11 = inlined_call_operand.hbm [shape: f32[1,32], index: 11, kind: input, shape index: {}]
  %s12 = inlined_call_operand.vmem [shape: bf16[32,64], index: 12, kind: input, shape index: {}]
  %s13 = inlined_call_operand.hbm [shape: f32[1,64], index: 13, kind: input, shape index: {}]
  %s14 = inlined_call_operand.vmem [shape: bf16[64,32], index: 14, kind: input, shape index: {}]
  %s15 = inlined_call_operand.hbm [shape: f32[1,32], index: 15, kind: input, shape index: {}]
  %s16 = inlined_call_operand.vmem [shape: bf16[32,32], index: 16, kind: input, shape index: {}]
  %s17 = inlined_call_operand.vmem [shape: bf16[32,32], index: 17, kind: input, shape index: {}]
  %s18 = inlined_call_operand.vmem [shape: f32[1,32], index: 18, kind: input, shape index: {}]
  %s19 = inlined_call_operand.vmem [shape: f32[1,32], index: 19, kind: input, shape index: {}]
  %s20 = inlined_call_operand.vmem [shape: f32[1,32], index: 20, kind: input, shape index: {}]
  %s21 = inlined_call_operand.hbm [shape: f32[2,8,32], index: 21, kind: output, shape index: {}]
  %s22 = sld [smem:[#allocation0]]
  $region161: #{tpu_custom_call.1} parent=0
    _
  %s24 = ssub.s32 1, %s22
  %s25 = scalar_select 0, %s24, %s22
  $region1: #{tpu_custom_call.1} parent=0
    #allocation2 [shape = 'u8[512]{0}', space=vmem, size = 0x400, scoped, tag = 'input window, operand 1, single buffered']
    #allocation3 [shape = 's32[2]{0}', space=sflag, size = 0x8, scoped, tag = 'scoped memory for tpu_custom_call.1']
    #allocation4 [shape = 's32[2]{0}', space=sflag, size = 0x8, scoped, tag = 'scoped memory for tpu_custom_call.1']
    #allocation5 [shape = 'u8[512]{0}', space=vmem, size = 0x400, scoped, tag = 'input window, operand 2, single buffered']
    #allocation6 [shape = 's32[1]{0}', space=sflag, size = 0x4, scoped, tag = 'scoped memory for tpu_custom_call.1']
    #allocation7 [shape = 'u8[512]{0}', space=vmem, size = 0x400, scoped, tag = 'input window, operand 4, single buffered']
    #allocation8 [shape = 'u8[512]{0}', space=vmem, size = 0x400, scoped, tag = 'input window, operand 6, single buffered']
    #allocation9 [shape = 's32[1]{0}', space=sflag, size = 0x4, scoped, tag = 'scoped memory for tpu_custom_call.1']
    #allocation10 [shape = 'u8[8192]{0}', space=vmem, size = 0x2000, scoped, tag = 'input window, operand 7, single buffered']
    #allocation11 [shape = 'u8[8192]{0}', space=vmem, size = 0x2000, scoped, tag = 'input window, operand 8, single buffered']
    #allocation12 [shape = 's32[1]{0}', space=sflag, size = 0x4, scoped, tag = 'scoped memory for tpu_custom_call.1']
    #allocation13 [shape = 'u8[512]{0}', space=vmem, size = 0x400, scoped, tag = 'input window, operand 9, single buffered']
    #allocation14 [shape = 'u8[512]{0}', space=vmem, size = 0x400, scoped, tag = 'input window, operand 10, single buffered']
    #allocation15 [shape = 's32[1]{0}', space=sflag, size = 0x4, scoped, tag = 'scoped memory for tpu_custom_call.1']
    #allocation16 [shape = 'u8[512]{0}', space=vmem, size = 0x400, scoped, tag = 'input window, operand 11, single buffered']
    #allocation17 [shape = 'u8[512]{0}', space=vmem, size = 0x400, scoped, tag = 'input window, operand 13, single buffered']
    #allocation18 [shape = 's32[1]{0}', space=sflag, size = 0x4, scoped, tag = 'scoped memory for tpu_custom_call.1']
    #allocation19 [shape = 'u8[512]{0}', space=vmem, size = 0x400, scoped, tag = 'input window, operand 15, single buffered']
    #allocation20 [shape = 'u8[8192]{0}', space=vmem, size = 0x2000, scoped, tag = 'output window, operand 0']
    %26 = vsyncpa [#allocation3], 0
    %27 = vsyncpa [#allocation6], 0
    %28 = vsyncpa [#allocation9], 0
    %29 = vsyncpa [#allocation12], 0
    %30 = vsyncpa [#allocation15], 0
    %31 = vsyncpa [#allocation18], 0
    %32 = vsyncpa [#allocation4], 0
    %s33 = scalar_lea.sflag [#allocation4], 1
    %34 = vsyncpa %s33, 0
    loop: start=0, step=1, limit=4
    $region2: #{tpu_custom_call.1} parent=1 // loop_pre_header
      _
    $region3: #{tpu_custom_call.1} parent=1 // loop_header
      %s36 = sphi 0, %s40
      %p37 = scmp.ge.s32.totalorder %s36, 4
      %s46 = sphi 0, %s48
      %s49 = sphi 0, %s46
      %s50 = sphi 0, %s49
      %s66 = sphi 0, %s50
      %s70 = sphi 0, %s70
      %s72 = sphi 0, %s70
      %s73 = sphi 0, %s72
      %s87 = sphi 0, %s73
      %s91 = sphi 0, %s91
      %s93 = sphi 0, %s91
      %s94 = sphi 0, %s93
      %s108 = sphi 0, %s94
      %s112 = sphi 0, %s112
      %s114 = sphi 0, %s112
      %s115 = sphi 0, %s114
      %s129 = sphi 0, %s115
      %s133 = sphi 0, %s133
      %s135 = sphi 0, %s133
      %s136 = sphi 0, %s135
      %s150 = sphi 0, %s136
      %s154 = sphi 0, %s154
      %s156 = sphi 0, %s154
      %s157 = sphi 0, %s156
      %s171 = sphi 0, %s157
      %s175 = sphi 0, %s175
      %s177 = sphi 0, %s175
      %s178 = sphi 0, %s177
      %s192 = sphi 0, %s178
      %s196 = sphi 0, %s196
      %s198 = sphi 0, %s196
      %s199 = sphi 0, %s198
      %s213 = sphi 0, %s199
      %s217 = sphi 0, %s217
      %s219 = sphi 0, %s217
      %s220 = sphi 0, %s219
      %s234 = sphi 0, %s220
      %s238 = sphi 0, %s238
      %s240 = sphi 0, %s238
      %s241 = sphi 0, %s240
      %s255 = sphi 0, %s241
      %s259 = sphi 0, %s259
      %s261 = sphi 0, %s259
      %s262 = sphi 0, %s261
      %s276 = sphi 0, %s262
      %s280 = sphi 0, %s280
      %s282 = sphi 0, %s280
      %s283 = sphi 0, %s282
      %s297 = sphi 0, %s283
      %s301 = sphi 0, %s301
      %s303 = sphi 0, %s301
      %s304 = sphi 0, %s303
      %s318 = sphi 0, %s304
      %s322 = sphi 0, %s322
      %s324 = sphi 0, %s322
      %s325 = sphi 0, %s324
      %s339 = sphi 0, %s325
      %s343 = sphi 0, %s343
      %s345 = sphi 0, %s343
      %s346 = sphi 0, %s345
      %s360 = sphi 0, %s346
      %s364 = sphi 0, %s364
      %s366 = sphi 0, %s364
      %s367 = sphi 0, %s366
      %s381 = sphi 0, %s367
      %s385 = sphi 0, %s385
      %s387 = sphi 0, %s385
      %s388 = sphi 0, %s387
      %s402 = sphi 0, %s388
      %s406 = sphi 0, %s406
      %s408 = sphi 0, %s406
      %s409 = sphi 0, %s408
      %s423 = sphi 0, %s409
      %s427 = sphi 0, %s427
      %s429 = sphi 0, %s427
      %s430 = sphi 0, %s429
      %s444 = sphi 0, %s430
      %s448 = sphi 0, %s448
      %s450 = sphi 0, %s448
      %s451 = sphi 0, %s450
      %s465 = sphi 0, %s451
      %s469 = sphi 0, %s469
      %s471 = sphi 0, %s469
      %s472 = sphi 0, %s471
      %s486 = sphi 0, %s472
      %s492 = sphi 0, %s494
      %s495 = sphi 0, %s492
      %s496 = sphi 0, %s495
      %s512 = sphi 0, %s496
    $region4: #{tpu_custom_call.1} parent=1 // loop_header_branch
      %39 = sbr.rel (%p37) target = $region8
    $region5: #{tpu_custom_call.1} parent=1 // loop_body
      %s41 = ssub.s32 %s36, 1
      %s42 = ssub.s32 %s36, 2
      %s43 = sadd.s32 %s36, 1
      %s44 = ssub.s32 %s36, %s43
      %p45 = scmp.eq.s32.totalorder %s44, 0
      %s47 = sadd.s32 %s46, 1
      %s48 = scalar_select %p45, %s46, %s47
      %p51 = pneg %p45
      %p52 = scmp.eq.s32.totalorder %s36, 1
      %p53 = por %p51, %p52
      %p54 = scmp.ne.s32.totalorder %s46, %s49
      %p55 = scmp.eq.s32.totalorder %s36, 0
      %p56 = por %p54, %p55
      %p57 = scmp.ne.s32.totalorder %s46, %s49
      %p58 = scmp.eq.s32.totalorder %s41, 1
      %p59 = por %p57, %p58
      %p60 = scmp.ne.s32.totalorder %s49, %s50
      %p61 = scmp.eq.s32.totalorder %s41, 0
      %p62 = por %p60, %p61
      %p63 = scmp.ne.s32.totalorder %s49, %s50
      %p64 = scmp.eq.s32.totalorder %s42, 1
      %p65 = por %p63, %p64
      %p67 = scmp.ne.s32.totalorder %s50, %s66
      %p68 = scmp.eq.s32.totalorder %s42, 0
      %p69 = por %p67, %p68
      %s71 = sadd.s32 %s70, 1
      %p74 = scmp.eq.s32.totalorder %s36, 1
      %p75 = scmp.ne.s32.totalorder %s70, %s72
      %p76 = scmp.eq.s32.totalorder %s36, 0
      %p77 = por %p75, %p76
      %p78 = scmp.ne.s32.totalorder %s70, %s72
      %p79 = scmp.eq.s32.totalorder %s41, 1
      %p80 = por %p78, %p79
      %p81 = scmp.ne.s32.totalorder %s72, %s73
      %p82 = scmp.eq.s32.totalorder %s41, 0
      %p83 = por %p81, %p82
      %p84 = scmp.ne.s32.totalorder %s72, %s73
      %p85 = scmp.eq.s32.totalorder %s42, 1
      %p86 = por %p84, %p85
      %p88 = scmp.ne.s32.totalorder %s73, %s87
      %p89 = scmp.eq.s32.totalorder %s42, 0
      %p90 = por %p88, %p89
      %s92 = sadd.s32 %s91, 1
      %p95 = scmp.eq.s32.totalorder %s36, 1
      %p96 = scmp.ne.s32.totalorder %s91, %s93
      %p97 = scmp.eq.s32.totalorder %s36, 0
      %p98 = por %p96, %p97
      %p99 = scmp.ne.s32.totalorder %s91, %s93
      %p100 = scmp.eq.s32.totalorder %s41, 1
      %p101 = por %p99, %p100
      %p102 = scmp.ne.s32.totalorder %s93, %s94
      %p103 = scmp.eq.s32.totalorder %s41, 0
      %p104 = por %p102, %p103
      %p105 = scmp.ne.s32.totalorder %s93, %s94
      %p106 = scmp.eq.s32.totalorder %s42, 1
      %p107 = por %p105, %p106
      %p109 = scmp.ne.s32.totalorder %s94, %s108
      %p110 = scmp.eq.s32.totalorder %s42, 0
      %p111 = por %p109, %p110
      %s113 = sadd.s32 %s112, 1
      %p116 = scmp.eq.s32.totalorder %s36, 1
      %p117 = scmp.ne.s32.totalorder %s112, %s114
      %p118 = scmp.eq.s32.totalorder %s36, 0
      %p119 = por %p117, %p118
      %p120 = scmp.ne.s32.totalorder %s112, %s114
      %p121 = scmp.eq.s32.totalorder %s41, 1
      %p122 = por %p120, %p121
      %p123 = scmp.ne.s32.totalorder %s114, %s115
      %p124 = scmp.eq.s32.totalorder %s41, 0
      %p125 = por %p123, %p124
      %p126 = scmp.ne.s32.totalorder %s114, %s115
      %p127 = scmp.eq.s32.totalorder %s42, 1
      %p128 = por %p126, %p127
      %p130 = scmp.ne.s32.totalorder %s115, %s129
      %p131 = scmp.eq.s32.totalorder %s42, 0
      %p132 = por %p130, %p131
      %s134 = sadd.s32 %s133, 1
      %p137 = scmp.eq.s32.totalorder %s36, 1
      %p138 = scmp.ne.s32.totalorder %s133, %s135
      %p139 = scmp.eq.s32.totalorder %s36, 0
      %p140 = por %p138, %p139
      %p141 = scmp.ne.s32.totalorder %s133, %s135
      %p142 = scmp.eq.s32.totalorder %s41, 1
      %p143 = por %p141, %p142
      %p144 = scmp.ne.s32.totalorder %s135, %s136
      %p145 = scmp.eq.s32.totalorder %s41, 0
      %p146 = por %p144, %p145
      %p147 = scmp.ne.s32.totalorder %s135, %s136
      %p148 = scmp.eq.s32.totalorder %s42, 1
      %p149 = por %p147, %p148
      %p151 = scmp.ne.s32.totalorder %s136, %s150
      %p152 = scmp.eq.s32.totalorder %s42, 0
      %p153 = por %p151, %p152
      %s155 = sadd.s32 %s154, 1
      %p158 = scmp.eq.s32.totalorder %s36, 1
      %p159 = scmp.ne.s32.totalorder %s154, %s156
      %p160 = scmp.eq.s32.totalorder %s36, 0
      %p161 = por %p159, %p160
      %p162 = scmp.ne.s32.totalorder %s154, %s156
      %p163 = scmp.eq.s32.totalorder %s41, 1
      %p164 = por %p162, %p163
      %p165 = scmp.ne.s32.totalorder %s156, %s157
      %p166 = scmp.eq.s32.totalorder %s41, 0
      %p167 = por %p165, %p166
      %p168 = scmp.ne.s32.totalorder %s156, %s157
      %p169 = scmp.eq.s32.totalorder %s42, 1
      %p170 = por %p168, %p169
      %p172 = scmp.ne.s32.totalorder %s157, %s171
      %p173 = scmp.eq.s32.totalorder %s42, 0
      %p174 = por %p172, %p173
      %s176 = sadd.s32 %s175, 1
      %p179 = scmp.eq.s32.totalorder %s36, 1
      %p180 = scmp.ne.s32.totalorder %s175, %s177
      %p181 = scmp.eq.s32.totalorder %s36, 0
      %p182 = por %p180, %p181
      %p183 = scmp.ne.s32.totalorder %s175, %s177
      %p184 = scmp.eq.s32.totalorder %s41, 1
      %p185 = por %p183, %p184
      %p186 = scmp.ne.s32.totalorder %s177, %s178
      %p187 = scmp.eq.s32.totalorder %s41, 0
      %p188 = por %p186, %p187
      %p189 = scmp.ne.s32.totalorder %s177, %s178
      %p190 = scmp.eq.s32.totalorder %s42, 1
      %p191 = por %p189, %p190
      %p193 = scmp.ne.s32.totalorder %s178, %s192
      %p194 = scmp.eq.s32.totalorder %s42, 0
      %p195 = por %p193, %p194
      %s197 = sadd.s32 %s196, 1
      %p200 = scmp.eq.s32.totalorder %s36, 1
      %p201 = scmp.ne.s32.totalorder %s196, %s198
      %p202 = scmp.eq.s32.totalorder %s36, 0
      %p203 = por %p201, %p202
      %p204 = scmp.ne.s32.totalorder %s196, %s198
      %p205 = scmp.eq.s32.totalorder %s41, 1
      %p206 = por %p204, %p205
      %p207 = scmp.ne.s32.totalorder %s198, %s199
      %p208 = scmp.eq.s32.totalorder %s41, 0
      %p209 = por %p207, %p208
      %p210 = scmp.ne.s32.totalorder %s198, %s199
      %p211 = scmp.eq.s32.totalorder %s42, 1
      %p212 = por %p210, %p211
      %p214 = scmp.ne.s32.totalorder %s199, %s213
      %p215 = scmp.eq.s32.totalorder %s42, 0
      %p216 = por %p214, %p215
      %s218 = sadd.s32 %s217, 1
      %p221 = scmp.eq.s32.totalorder %s36, 1
      %p222 = scmp.ne.s32.totalorder %s217, %s219
      %p223 = scmp.eq.s32.totalorder %s36, 0
      %p224 = por %p222, %p223
      %p225 = scmp.ne.s32.totalorder %s217, %s219
      %p226 = scmp.eq.s32.totalorder %s41, 1
      %p227 = por %p225, %p226
      %p228 = scmp.ne.s32.totalorder %s219, %s220
      %p229 = scmp.eq.s32.totalorder %s41, 0
      %p230 = por %p228, %p229
      %p231 = scmp.ne.s32.totalorder %s219, %s220
      %p232 = scmp.eq.s32.totalorder %s42, 1
      %p233 = por %p231, %p232
      %p235 = scmp.ne.s32.totalorder %s220, %s234
      %p236 = scmp.eq.s32.totalorder %s42, 0
      %p237 = por %p235, %p236
      %s239 = sadd.s32 %s238, 1
      %p242 = scmp.eq.s32.totalorder %s36, 1
      %p243 = scmp.ne.s32.totalorder %s238, %s240
      %p244 = scmp.eq.s32.totalorder %s36, 0
      %p245 = por %p243, %p244
      %p246 = scmp.ne.s32.totalorder %s238, %s240
      %p247 = scmp.eq.s32.totalorder %s41, 1
      %p248 = por %p246, %p247
      %p249 = scmp.ne.s32.totalorder %s240, %s241
      %p250 = scmp.eq.s32.totalorder %s41, 0
      %p251 = por %p249, %p250
      %p252 = scmp.ne.s32.totalorder %s240, %s241
      %p253 = scmp.eq.s32.totalorder %s42, 1
      %p254 = por %p252, %p253
      %p256 = scmp.ne.s32.totalorder %s241, %s255
      %p257 = scmp.eq.s32.totalorder %s42, 0
      %p258 = por %p256, %p257
      %s260 = sadd.s32 %s259, 1
      %p263 = scmp.eq.s32.totalorder %s36, 1
      %p264 = scmp.ne.s32.totalorder %s259, %s261
      %p265 = scmp.eq.s32.totalorder %s36, 0
      %p266 = por %p264, %p265
      %p267 = scmp.ne.s32.totalorder %s259, %s261
      %p268 = scmp.eq.s32.totalorder %s41, 1
      %p269 = por %p267, %p268
      %p270 = scmp.ne.s32.totalorder %s261, %s262
      %p271 = scmp.eq.s32.totalorder %s41, 0
      %p272 = por %p270, %p271
      %p273 = scmp.ne.s32.totalorder %s261, %s262
      %p274 = scmp.eq.s32.totalorder %s42, 1
      %p275 = por %p273, %p274
      %p277 = scmp.ne.s32.totalorder %s262, %s276
      %p278 = scmp.eq.s32.totalorder %s42, 0
      %p279 = por %p277, %p278
      %s281 = sadd.s32 %s280, 1
      %p284 = scmp.eq.s32.totalorder %s36, 1
      %p285 = scmp.ne.s32.totalorder %s280, %s282
      %p286 = scmp.eq.s32.totalorder %s36, 0
      %p287 = por %p285, %p286
      %p288 = scmp.ne.s32.totalorder %s280, %s282
      %p289 = scmp.eq.s32.totalorder %s41, 1
      %p290 = por %p288, %p289
      %p291 = scmp.ne.s32.totalorder %s282, %s283
      %p292 = scmp.eq.s32.totalorder %s41, 0
      %p293 = por %p291, %p292
      %p294 = scmp.ne.s32.totalorder %s282, %s283
      %p295 = scmp.eq.s32.totalorder %s42, 1
      %p296 = por %p294, %p295
      %p298 = scmp.ne.s32.totalorder %s283, %s297
      %p299 = scmp.eq.s32.totalorder %s42, 0
      %p300 = por %p298, %p299
      %s302 = sadd.s32 %s301, 1
      %p305 = scmp.eq.s32.totalorder %s36, 1
      %p306 = scmp.ne.s32.totalorder %s301, %s303
      %p307 = scmp.eq.s32.totalorder %s36, 0
      %p308 = por %p306, %p307
      %p309 = scmp.ne.s32.totalorder %s301, %s303
      %p310 = scmp.eq.s32.totalorder %s41, 1
      %p311 = por %p309, %p310
      %p312 = scmp.ne.s32.totalorder %s303, %s304
      %p313 = scmp.eq.s32.totalorder %s41, 0
      %p314 = por %p312, %p313
      %p315 = scmp.ne.s32.totalorder %s303, %s304
      %p316 = scmp.eq.s32.totalorder %s42, 1
      %p317 = por %p315, %p316
      %p319 = scmp.ne.s32.totalorder %s304, %s318
      %p320 = scmp.eq.s32.totalorder %s42, 0
      %p321 = por %p319, %p320
      %s323 = sadd.s32 %s322, 1
      %p326 = scmp.eq.s32.totalorder %s36, 1
      %p327 = scmp.ne.s32.totalorder %s322, %s324
      %p328 = scmp.eq.s32.totalorder %s36, 0
      %p329 = por %p327, %p328
      %p330 = scmp.ne.s32.totalorder %s322, %s324
      %p331 = scmp.eq.s32.totalorder %s41, 1
      %p332 = por %p330, %p331
      %p333 = scmp.ne.s32.totalorder %s324, %s325
      %p334 = scmp.eq.s32.totalorder %s41, 0
      %p335 = por %p333, %p334
      %p336 = scmp.ne.s32.totalorder %s324, %s325
      %p337 = scmp.eq.s32.totalorder %s42, 1
      %p338 = por %p336, %p337
      %p340 = scmp.ne.s32.totalorder %s325, %s339
      %p341 = scmp.eq.s32.totalorder %s42, 0
      %p342 = por %p340, %p341
      %s344 = sadd.s32 %s343, 1
      %p347 = scmp.eq.s32.totalorder %s36, 1
      %p348 = scmp.ne.s32.totalorder %s343, %s345
      %p349 = scmp.eq.s32.totalorder %s36, 0
      %p350 = por %p348, %p349
      %p351 = scmp.ne.s32.totalorder %s343, %s345
      %p352 = scmp.eq.s32.totalorder %s41, 1
      %p353 = por %p351, %p352
      %p354 = scmp.ne.s32.totalorder %s345, %s346
      %p355 = scmp.eq.s32.totalorder %s41, 0
      %p356 = por %p354, %p355
      %p357 = scmp.ne.s32.totalorder %s345, %s346
      %p358 = scmp.eq.s32.totalorder %s42, 1
      %p359 = por %p357, %p358
      %p361 = scmp.ne.s32.totalorder %s346, %s360
      %p362 = scmp.eq.s32.totalorder %s42, 0
      %p363 = por %p361, %p362
      %s365 = sadd.s32 %s364, 1
      %p368 = scmp.eq.s32.totalorder %s36, 1
      %p369 = scmp.ne.s32.totalorder %s364, %s366
      %p370 = scmp.eq.s32.totalorder %s36, 0
      %p371 = por %p369, %p370
      %p372 = scmp.ne.s32.totalorder %s364, %s366
      %p373 = scmp.eq.s32.totalorder %s41, 1
      %p374 = por %p372, %p373
      %p375 = scmp.ne.s32.totalorder %s366, %s367
      %p376 = scmp.eq.s32.totalorder %s41, 0
      %p377 = por %p375, %p376
      %p378 = scmp.ne.s32.totalorder %s366, %s367
      %p379 = scmp.eq.s32.totalorder %s42, 1
      %p380 = por %p378, %p379
      %p382 = scmp.ne.s32.totalorder %s367, %s381
      %p383 = scmp.eq.s32.totalorder %s42, 0
      %p384 = por %p382, %p383
      %s386 = sadd.s32 %s385, 1
      %p389 = scmp.eq.s32.totalorder %s36, 1
      %p390 = scmp.ne.s32.totalorder %s385, %s387
      %p391 = scmp.eq.s32.totalorder %s36, 0
      %p392 = por %p390, %p391
      %p393 = scmp.ne.s32.totalorder %s385, %s387
      %p394 = scmp.eq.s32.totalorder %s41, 1
      %p395 = por %p393, %p394
      %p396 = scmp.ne.s32.totalorder %s387, %s388
      %p397 = scmp.eq.s32.totalorder %s41, 0
      %p398 = por %p396, %p397
      %p399 = scmp.ne.s32.totalorder %s387, %s388
      %p400 = scmp.eq.s32.totalorder %s42, 1
      %p401 = por %p399, %p400
      %p403 = scmp.ne.s32.totalorder %s388, %s402
      %p404 = scmp.eq.s32.totalorder %s42, 0
      %p405 = por %p403, %p404
      %s407 = sadd.s32 %s406, 1
      %p410 = scmp.eq.s32.totalorder %s36, 1
      %p411 = scmp.ne.s32.totalorder %s406, %s408
      %p412 = scmp.eq.s32.totalorder %s36, 0
      %p413 = por %p411, %p412
      %p414 = scmp.ne.s32.totalorder %s406, %s408
      %p415 = scmp.eq.s32.totalorder %s41, 1
      %p416 = por %p414, %p415
      %p417 = scmp.ne.s32.totalorder %s408, %s409
      %p418 = scmp.eq.s32.totalorder %s41, 0
      %p419 = por %p417, %p418
      %p420 = scmp.ne.s32.totalorder %s408, %s409
      %p421 = scmp.eq.s32.totalorder %s42, 1
      %p422 = por %p420, %p421
      %p424 = scmp.ne.s32.totalorder %s409, %s423
      %p425 = scmp.eq.s32.totalorder %s42, 0
      %p426 = por %p424, %p425
      %s428 = sadd.s32 %s427, 1
      %p431 = scmp.eq.s32.totalorder %s36, 1
      %p432 = scmp.ne.s32.totalorder %s427, %s429
      %p433 = scmp.eq.s32.totalorder %s36, 0
      %p434 = por %p432, %p433
      %p435 = scmp.ne.s32.totalorder %s427, %s429
      %p436 = scmp.eq.s32.totalorder %s41, 1
      %p437 = por %p435, %p436
      %p438 = scmp.ne.s32.totalorder %s429, %s430
      %p439 = scmp.eq.s32.totalorder %s41, 0
      %p440 = por %p438, %p439
      %p441 = scmp.ne.s32.totalorder %s429, %s430
      %p442 = scmp.eq.s32.totalorder %s42, 1
      %p443 = por %p441, %p442
      %p445 = scmp.ne.s32.totalorder %s430, %s444
      %p446 = scmp.eq.s32.totalorder %s42, 0
      %p447 = por %p445, %p446
      %s449 = sadd.s32 %s448, 1
      %p452 = scmp.eq.s32.totalorder %s36, 1
      %p453 = scmp.ne.s32.totalorder %s448, %s450
      %p454 = scmp.eq.s32.totalorder %s36, 0
      %p455 = por %p453, %p454
      %p456 = scmp.ne.s32.totalorder %s448, %s450
      %p457 = scmp.eq.s32.totalorder %s41, 1
      %p458 = por %p456, %p457
      %p459 = scmp.ne.s32.totalorder %s450, %s451
      %p460 = scmp.eq.s32.totalorder %s41, 0
      %p461 = por %p459, %p460
      %p462 = scmp.ne.s32.totalorder %s450, %s451
      %p463 = scmp.eq.s32.totalorder %s42, 1
      %p464 = por %p462, %p463
      %p466 = scmp.ne.s32.totalorder %s451, %s465
      %p467 = scmp.eq.s32.totalorder %s42, 0
      %p468 = por %p466, %p467
      %s470 = sadd.s32 %s469, 1
      %p473 = scmp.eq.s32.totalorder %s36, 1
      %p474 = scmp.ne.s32.totalorder %s469, %s471
      %p475 = scmp.eq.s32.totalorder %s36, 0
      %p476 = por %p474, %p475
      %p477 = scmp.ne.s32.totalorder %s469, %s471
      %p478 = scmp.eq.s32.totalorder %s41, 1
      %p479 = por %p477, %p478
      %p480 = scmp.ne.s32.totalorder %s471, %s472
      %p481 = scmp.eq.s32.totalorder %s41, 0
      %p482 = por %p480, %p481
      %p483 = scmp.ne.s32.totalorder %s471, %s472
      %p484 = scmp.eq.s32.totalorder %s42, 1
      %p485 = por %p483, %p484
      %p487 = scmp.ne.s32.totalorder %s472, %s486
      %p488 = scmp.eq.s32.totalorder %s42, 0
      %p489 = por %p487, %p488
      %s490 = ssub.s32 %s36, %s43
      %p491 = scmp.eq.s32.totalorder %s490, 0
      %s493 = sadd.s32 %s492, 1
      %s494 = scalar_select %p491, %s492, %s493
      %p497 = pneg %p491
      %p498 = scmp.eq.s32.totalorder %s36, 1
      %p499 = por %p497, %p498
      %p500 = scmp.ne.s32.totalorder %s492, %s495
      %p501 = scmp.eq.s32.totalorder %s36, 0
      %p502 = por %p500, %p501
      %p503 = scmp.ne.s32.totalorder %s492, %s495
      %p504 = scmp.eq.s32.totalorder %s41, 1
      %p505 = por %p503, %p504
      %p506 = scmp.ne.s32.totalorder %s495, %s496
      %p507 = scmp.eq.s32.totalorder %s41, 0
      %p508 = por %p506, %p507
      %p509 = scmp.ne.s32.totalorder %s495, %s496
      %p510 = scmp.eq.s32.totalorder %s42, 1
      %p511 = por %p509, %p510
      %p513 = scmp.ne.s32.totalorder %s496, %s512
      %p514 = scmp.eq.s32.totalorder %s42, 0
      %p515 = por %p513, %p514
      %p516 = scmp.le.s32.totalorder 1, %s36
      %p517 = scmp.lt.s32.totalorder %s36, 3
      %p518 = pnand %p516, %p517
      %p519 = pneg %p518
      // Predicated region
      $region9: #{tpu_custom_call.1} parent=5 // pred_check
        _
      $region10: #{tpu_custom_call.1} parent=5 // pred_check_branch
        %521 = sbr.rel (%p518) target = $region12
      $region11: #{tpu_custom_call.1} parent=5 // pred_region
        %s522 = ssub.s32 %s36, 1
        // Predicated region
        $region13: #{tpu_custom_call.1} parent=11 // pred_check
          %p523 = pneg %p83
        $region14: #{tpu_custom_call.1} parent=11 // pred_check_branch
          %525 = sbr.rel (%p523) target = $region16
        $region15: #{tpu_custom_call.1} parent=11 // pred_region
          %s527 = ssub.s32 16, 16
          %528 = vsyncadd [#allocation3], %s527
          %s530 = sshll.u32 [#allocation2], 4
          %s531 = int_to_ptr.vmem [resolvable:$true] %s530
          %533 = dma.hbm_to_vmem [thread:$0]  %s1, 16, %s531, [#allocation3]
        $region16: #{tpu_custom_call.1} parent=11 // pred_fallthru
          _
        // Predicated region
        $region17: #{tpu_custom_call.1} parent=11 // pred_check
          %p534 = pneg %p104
        $region18: #{tpu_custom_call.1} parent=11 // pred_check_branch
          %536 = sbr.rel (%p534) target = $region20
        $region19: #{tpu_custom_call.1} parent=11 // pred_region
          %s538 = ssub.s32 16, 16
          %539 = vsyncadd [#allocation6], %s538
          %s541 = sshll.u32 [#allocation5], 4
          %s542 = int_to_ptr.vmem [resolvable:$true] %s541
          %544 = dma.hbm_to_vmem [thread:$0]  %s2, 16, %s542, [#allocation6]
        $region20: #{tpu_custom_call.1} parent=11 // pred_fallthru
          _
        // Predicated region
        $region21: #{tpu_custom_call.1} parent=11 // pred_check
          %p545 = pneg %p125
        $region22: #{tpu_custom_call.1} parent=11 // pred_check_branch
          %547 = sbr.rel (%p545) target = $region24
        $region23: #{tpu_custom_call.1} parent=11 // pred_region
          _
        $region24: #{tpu_custom_call.1} parent=11 // pred_fallthru
          _
        // Predicated region
        $region25: #{tpu_custom_call.1} parent=11 // pred_check
          %p548 = pneg %p146
        $region26: #{tpu_custom_call.1} parent=11 // pred_check_branch
          %550 = sbr.rel (%p548) target = $region28
        $region27: #{tpu_custom_call.1} parent=11 // pred_region
          %s552 = ssub.s32 16, 16
          %553 = vsyncadd [#allocation6], %s552
          %s555 = sshll.u32 [#allocation7], 4
          %s556 = int_to_ptr.vmem [resolvable:$true] %s555
          %558 = dma.hbm_to_vmem [thread:$0]  %s4, 16, %s556, [#allocation6]
        $region28: #{tpu_custom_call.1} parent=11 // pred_fallthru
          _
        // Predicated region
        $region29: #{tpu_custom_call.1} parent=11 // pred_check
          %p559 = pneg %p167
        $region30: #{tpu_custom_call.1} parent=11 // pred_check_branch
          %561 = sbr.rel (%p559) target = $region32
        $region31: #{tpu_custom_call.1} parent=11 // pred_region
          _
        $region32: #{tpu_custom_call.1} parent=11 // pred_fallthru
          _
        // Predicated region
        $region33: #{tpu_custom_call.1} parent=11 // pred_check
          %p562 = pneg %p188
        $region34: #{tpu_custom_call.1} parent=11 // pred_check_branch
          %564 = sbr.rel (%p562) target = $region36
        $region35: #{tpu_custom_call.1} parent=11 // pred_region
          %s566 = ssub.s32 16, 16
          %567 = vsyncadd [#allocation9], %s566
          %s569 = sshll.u32 [#allocation8], 4
          %s570 = int_to_ptr.vmem [resolvable:$true] %s569
          %572 = dma.hbm_to_vmem [thread:$0]  %s6, 16, %s570, [#allocation9]
        $region36: #{tpu_custom_call.1} parent=11 // pred_fallthru
          _
        // Predicated region
        $region37: #{tpu_custom_call.1} parent=11 // pred_check
          %p573 = pneg %p209
        $region38: #{tpu_custom_call.1} parent=11 // pred_check_branch
          %575 = sbr.rel (%p573) target = $region40
        $region39: #{tpu_custom_call.1} parent=11 // pred_region
          %s577 = ssub.s32 256, 256
          %578 = vsyncadd [#allocation9], %s577
          %s579 = sshll.u32 [#allocation10], 4
          %s580 = int_to_ptr.vmem [resolvable:$true] %s579
          %585 = dma.hbm_to_vmem [thread:$0]  %s7, 256, %s580, [#allocation9], 64, 64, 4
        $region40: #{tpu_custom_call.1} parent=11 // pred_fallthru
          _
        // Predicated region
        $region41: #{tpu_custom_call.1} parent=11 // pred_check
          %p586 = pneg %p230
        $region42: #{tpu_custom_call.1} parent=11 // pred_check_branch
          %588 = sbr.rel (%p586) target = $region44
        $region43: #{tpu_custom_call.1} parent=11 // pred_region
          %s590 = ssub.s32 256, 256
          %591 = vsyncadd [#allocation12], %s590
          %s592 = sshll.u32 [#allocation11], 4
          %s593 = int_to_ptr.vmem [resolvable:$true] %s592
          %598 = dma.hbm_to_vmem [thread:$0]  %s8, 256, %s593, [#allocation12], 64, 64, 4
        $region44: #{tpu_custom_call.1} parent=11 // pred_fallthru
          _
        // Predicated region
        $region45: #{tpu_custom_call.1} parent=11 // pred_check
          %p599 = pneg %p251
        $region46: #{tpu_custom_call.1} parent=11 // pred_check_branch
          %601 = sbr.rel (%p599) target = $region48
        $region47: #{tpu_custom_call.1} parent=11 // pred_region
          %s603 = ssub.s32 16, 16
          %604 = vsyncadd [#allocation12], %s603
          %s606 = sshll.u32 [#allocation13], 4
          %s607 = int_to_ptr.vmem [resolvable:$true] %s606
          %609 = dma.hbm_to_vmem [thread:$0]  %s9, 16, %s607, [#allocation12]
        $region48: #{tpu_custom_call.1} parent=11 // pred_fallthru
          _
        // Predicated region
        $region49: #{tpu_custom_call.1} parent=11 // pred_check
          %p610 = pneg %p272
        $region50: #{tpu_custom_call.1} parent=11 // pred_check_branch
          %612 = sbr.rel (%p610) target = $region52
        $region51: #{tpu_custom_call.1} parent=11 // pred_region
          %s614 = ssub.s32 16, 16
          %615 = vsyncadd [#allocation15], %s614
          %s617 = sshll.u32 [#allocation14], 4
          %s618 = int_to_ptr.vmem [resolvable:$true] %s617
          %620 = dma.hbm_to_vmem [thread:$0]  %s10, 16, %s618, [#allocation15]
        $region52: #{tpu_custom_call.1} parent=11 // pred_fallthru
          _
        // Predicated region
        $region53: #{tpu_custom_call.1} parent=11 // pred_check
          %p621 = pneg %p293
        $region54: #{tpu_custom_call.1} parent=11 // pred_check_branch
          %623 = sbr.rel (%p621) target = $region56
        $region55: #{tpu_custom_call.1} parent=11 // pred_region
          %s625 = ssub.s32 16, 16
          %626 = vsyncadd [#allocation15], %s625
          %s628 = sshll.u32 [#allocation16], 4
          %s629 = int_to_ptr.vmem [resolvable:$true] %s628
          %631 = dma.hbm_to_vmem [thread:$0]  %s11, 16, %s629, [#allocation15]
        $region56: #{tpu_custom_call.1} parent=11 // pred_fallthru
          _
        // Predicated region
        $region57: #{tpu_custom_call.1} parent=11 // pred_check
          %p632 = pneg %p314
        $region58: #{tpu_custom_call.1} parent=11 // pred_check_branch
          %634 = sbr.rel (%p632) target = $region60
        $region59: #{tpu_custom_call.1} parent=11 // pred_region
          _
        $region60: #{tpu_custom_call.1} parent=11 // pred_fallthru
          _
        // Predicated region
        $region61: #{tpu_custom_call.1} parent=11 // pred_check
          %p635 = pneg %p335
        $region62: #{tpu_custom_call.1} parent=11 // pred_check_branch
          %637 = sbr.rel (%p635) target = $region64
        $region63: #{tpu_custom_call.1} parent=11 // pred_region
          %s639 = ssub.s32 16, 16
          %640 = vsyncadd [#allocation18], %s639
          %s642 = sshll.u32 [#allocation17], 4
          %s643 = int_to_ptr.vmem [resolvable:$true] %s642
          %645 = dma.hbm_to_vmem [thread:$0]  %s13, 16, %s643, [#allocation18]
        $region64: #{tpu_custom_call.1} parent=11 // pred_fallthru
          _
        // Predicated region
        $region65: #{tpu_custom_call.1} parent=11 // pred_check
          %p646 = pneg %p356
        $region66: #{tpu_custom_call.1} parent=11 // pred_check_branch
          %648 = sbr.rel (%p646) target = $region68
        $region67: #{tpu_custom_call.1} parent=11 // pred_region
          _
        $region68: #{tpu_custom_call.1} parent=11 // pred_fallthru
          _
        // Predicated region
        $region69: #{tpu_custom_call.1} parent=11 // pred_check
          %p649 = pneg %p377
        $region70: #{tpu_custom_call.1} parent=11 // pred_check_branch
          %651 = sbr.rel (%p649) target = $region72
        $region71: #{tpu_custom_call.1} parent=11 // pred_region
          %s653 = ssub.s32 16, 16
          %654 = vsyncadd [#allocation18], %s653
          %s656 = sshll.u32 [#allocation19], 4
          %s657 = int_to_ptr.vmem [resolvable:$true] %s656
          %659 = dma.hbm_to_vmem [thread:$0]  %s15, 16, %s657, [#allocation18]
        $region72: #{tpu_custom_call.1} parent=11 // pred_fallthru
          _
        // Predicated region
        $region73: #{tpu_custom_call.1} parent=11 // pred_check
          %p660 = pneg %p398
        $region74: #{tpu_custom_call.1} parent=11 // pred_check_branch
          %662 = sbr.rel (%p660) target = $region76
        $region75: #{tpu_custom_call.1} parent=11 // pred_region
          _
        $region76: #{tpu_custom_call.1} parent=11 // pred_fallthru
          _
        // Predicated region
        $region77: #{tpu_custom_call.1} parent=11 // pred_check
          %p663 = pneg %p419
        $region78: #{tpu_custom_call.1} parent=11 // pred_check_branch
          %665 = sbr.rel (%p663) target = $region80
        $region79: #{tpu_custom_call.1} parent=11 // pred_region
          _
        $region80: #{tpu_custom_call.1} parent=11 // pred_fallthru
          _
        // Predicated region
        $region81: #{tpu_custom_call.1} parent=11 // pred_check
          %p666 = pneg %p440
        $region82: #{tpu_custom_call.1} parent=11 // pred_check_branch
          %668 = sbr.rel (%p666) target = $region84
        $region83: #{tpu_custom_call.1} parent=11 // pred_region
          _
        $region84: #{tpu_custom_call.1} parent=11 // pred_fallthru
          _
        // Predicated region
        $region85: #{tpu_custom_call.1} parent=11 // pred_check
          %p669 = pneg %p461
        $region86: #{tpu_custom_call.1} parent=11 // pred_check_branch
          %671 = sbr.rel (%p669) target = $region88
        $region87: #{tpu_custom_call.1} parent=11 // pred_region
          _
        $region88: #{tpu_custom_call.1} parent=11 // pred_fallthru
          _
        // Predicated region
        $region89: #{tpu_custom_call.1} parent=11 // pred_check
          %p672 = pneg %p482
        $region90: #{tpu_custom_call.1} parent=11 // pred_check_branch
          %674 = sbr.rel (%p672) target = $region92
        $region91: #{tpu_custom_call.1} parent=11 // pred_region
          _
        $region92: #{tpu_custom_call.1} parent=11 // pred_fallthru
          _
      $region12: #{tpu_custom_call.1} parent=5 // pred_fallthru
        _
      %p675 = scmp.lt.s32.totalorder %s36, 2
      // Predicated region
      $region93: #{tpu_custom_call.1} parent=5 // pred_check
        %p676 = pneg %p675
      $region94: #{tpu_custom_call.1} parent=5 // pred_check_branch
        %678 = sbr.rel (%p676) target = $region96
      $region95: #{tpu_custom_call.1} parent=5 // pred_region
        // Predicated region
        $region97: #{tpu_custom_call.1} parent=95 // pred_check
          %p679 = pneg %p56
        $region98: #{tpu_custom_call.1} parent=95 // pred_check_branch
          %681 = sbr.rel (%p679) target = $region100
        $region99: #{tpu_custom_call.1} parent=95 // pred_region
          %p682 = scmp.lt.s32.totalorder %s36, 1
          %s683 = scalar_select %p682, %s36, 1
          %s684 = smul.addr %s683, 8
          %s685 = scalar_lea.vmem %s0, %s684
        $region100: #{tpu_custom_call.1} parent=95 // pred_fallthru
          _
      $region96: #{tpu_custom_call.1} parent=5 // pred_fallthru
        _
      %p686 = scmp.le.s32.totalorder 1, %s36
      %p687 = scmp.lt.s32.totalorder %s36, 3
      %p688 = pnand %p686, %p687
      %p689 = pneg %p688
      // Predicated region
      $region101: #{tpu_custom_call.1} parent=5 // pred_check
        _
      $region102: #{tpu_custom_call.1} parent=5 // pred_check_branch
        %691 = sbr.rel (%p688) target = $region104
      $region103: #{tpu_custom_call.1} parent=5 // pred_region
        %s692 = ssub.s32 %s36, 1
        // Predicated region
        $region105: #{tpu_custom_call.1} parent=103 // pred_check
          %p693 = pneg %p83
        $region106: #{tpu_custom_call.1} parent=103 // pred_check_branch
          %695 = sbr.rel (%p693) target = $region108
        $region107: #{tpu_custom_call.1} parent=103 // pred_region
          %696 = dma.done [#allocation3], 16
        $region108: #{tpu_custom_call.1} parent=103 // pred_fallthru
          _
        // Predicated region
        $region109: #{tpu_custom_call.1} parent=103 // pred_check
          %p697 = pneg %p104
        $region110: #{tpu_custom_call.1} parent=103 // pred_check_branch
          %699 = sbr.rel (%p697) target = $region112
        $region111: #{tpu_custom_call.1} parent=103 // pred_region
          %700 = dma.done [#allocation6], 16
        $region112: #{tpu_custom_call.1} parent=103 // pred_fallthru
          _
        // Predicated region
        $region113: #{tpu_custom_call.1} parent=103 // pred_check
          %p701 = pneg %p146
        $region114: #{tpu_custom_call.1} parent=103 // pred_check_branch
          %703 = sbr.rel (%p701) target = $region116
        $region115: #{tpu_custom_call.1} parent=103 // pred_region
          %704 = dma.done [#allocation6], 16
        $region116: #{tpu_custom_call.1} parent=103 // pred_fallthru
          _
        // Predicated region
        $region117: #{tpu_custom_call.1} parent=103 // pred_check
          %p705 = pneg %p188
        $region118: #{tpu_custom_call.1} parent=103 // pred_check_branch
          %707 = sbr.rel (%p705) target = $region120
        $region119: #{tpu_custom_call.1} parent=103 // pred_region
          %708 = dma.done [#allocation9], 16
        $region120: #{tpu_custom_call.1} parent=103 // pred_fallthru
          _
        // Predicated region
        $region121: #{tpu_custom_call.1} parent=103 // pred_check
          %p709 = pneg %p209
        $region122: #{tpu_custom_call.1} parent=103 // pred_check_branch
          %711 = sbr.rel (%p709) target = $region124
        $region123: #{tpu_custom_call.1} parent=103 // pred_region
          %712 = dma.done [#allocation9], 256
        $region124: #{tpu_custom_call.1} parent=103 // pred_fallthru
          _
        // Predicated region
        $region125: #{tpu_custom_call.1} parent=103 // pred_check
          %p713 = pneg %p230
        $region126: #{tpu_custom_call.1} parent=103 // pred_check_branch
          %715 = sbr.rel (%p713) target = $region128
        $region127: #{tpu_custom_call.1} parent=103 // pred_region
          %716 = dma.done [#allocation12], 256
        $region128: #{tpu_custom_call.1} parent=103 // pred_fallthru
          _
        // Predicated region
        $region129: #{tpu_custom_call.1} parent=103 // pred_check
          %p717 = pneg %p251
        $region130: #{tpu_custom_call.1} parent=103 // pred_check_branch
          %719 = sbr.rel (%p717) target = $region132
        $region131: #{tpu_custom_call.1} parent=103 // pred_region
          %720 = dma.done [#allocation12], 16
        $region132: #{tpu_custom_call.1} parent=103 // pred_fallthru
          _
        // Predicated region
        $region133: #{tpu_custom_call.1} parent=103 // pred_check
          %p721 = pneg %p272
        $region134: #{tpu_custom_call.1} parent=103 // pred_check_branch
          %723 = sbr.rel (%p721) target = $region136
        $region135: #{tpu_custom_call.1} parent=103 // pred_region
          %724 = dma.done [#allocation15], 16
        $region136: #{tpu_custom_call.1} parent=103 // pred_fallthru
          _
        // Predicated region
        $region137: #{tpu_custom_call.1} parent=103 // pred_check
          %p725 = pneg %p293
        $region138: #{tpu_custom_call.1} parent=103 // pred_check_branch
          %727 = sbr.rel (%p725) target = $region140
        $region139: #{tpu_custom_call.1} parent=103 // pred_region
          %728 = dma.done [#allocation15], 16
        $region140: #{tpu_custom_call.1} parent=103 // pred_fallthru
          _
        // Predicated region
        $region141: #{tpu_custom_call.1} parent=103 // pred_check
          %p729 = pneg %p335
        $region142: #{tpu_custom_call.1} parent=103 // pred_check_branch
          %731 = sbr.rel (%p729) target = $region144
        $region143: #{tpu_custom_call.1} parent=103 // pred_region
          %732 = dma.done [#allocation18], 16
        $region144: #{tpu_custom_call.1} parent=103 // pred_fallthru
          _
        // Predicated region
        $region145: #{tpu_custom_call.1} parent=103 // pred_check
          %p733 = pneg %p377
        $region146: #{tpu_custom_call.1} parent=103 // pred_check_branch
          %735 = sbr.rel (%p733) target = $region148
        $region147: #{tpu_custom_call.1} parent=103 // pred_region
          %736 = dma.done [#allocation18], 16
        $region148: #{tpu_custom_call.1} parent=103 // pred_fallthru
          _
        %p737 = scmp.lt.s32.totalorder %s41, 1
        %s738 = scalar_select %p737, %s41, 1
        %s739 = smul.addr %s738, 8
        %s740 = scalar_lea.vmem %s0, %s739
        %p741 = pneg %p62
        %p742 = pneg %p59
        %p743 = pneg %p83
        %p744 = pneg %p80
        %p745 = pneg %p104
        %p746 = pneg %p101
        %p747 = pneg %p125
        %p748 = pneg %p122
        %p749 = pneg %p146
        %p750 = pneg %p143
        %p751 = pneg %p167
        %p752 = pneg %p164
        %p753 = pneg %p188
        %p754 = pneg %p185
        %p755 = pneg %p209
        %p756 = pneg %p206
        %p757 = pneg %p230
        %p758 = pneg %p227
        %p759 = pneg %p251
        %p760 = pneg %p248
        %p761 = pneg %p272
        %p762 = pneg %p269
        %p763 = pneg %p293
        %p764 = pneg %p290
        %p765 = pneg %p314
        %p766 = pneg %p311
        %p767 = pneg %p335
        %p768 = pneg %p332
        %p769 = pneg %p356
        %p770 = pneg %p353
        %p771 = pneg %p377
        %p772 = pneg %p374
        %p773 = pneg %p398
        %p774 = pneg %p395
        %p775 = pneg %p419
        %p776 = pneg %p416
        %p777 = pneg %p440
        %p778 = pneg %p437
        %p779 = pneg %p461
        %p780 = pneg %p458
        %p781 = pneg %p482
        %p782 = pneg %p479
        %p783 = pneg %p508
        %p784 = pneg %p505
        %s785 = sand.u32 %s495, 1
        %s786 = scalar_lea.sflag [#allocation4], %s785
        %s787 = sand.u32 %s495, 1
        %s788 = smul.addr %s787, 8
        %s789 = scalar_lea.vmem [#allocation20], %s788
        %p790 = scmp.lt.s32.totalorder %s41, 1
        %s791 = scalar_select %p790, %s41, 1
        %s792 = smul.addr %s791, 8
        %s793 = scalar_lea.vmem %s0, %s792
        %v795 = vld [vmem:[%s793] sm:$0xff]
        %v796 = vld [vmem:[#allocation2] sm:$0x1]
        %v797 = vld [vmem:[#allocation5] sm:$0x1]
        %vm798 = vcmask 261120
        %v799 = vsel %vm798, %v795, 0.0
        %800 = vadd.xlane.f32.xlu0 %v799
        %v801 = vpop.xlane.xlu0 %800
        %v802 = vrcp.pop 32.0
        %v803 = vmul.f32 %v801, %v802
        %v804 = vsub.f32 %v795, %v803
        %v805 = vmul.f32 %v804, %v804
        %v806 = vsel %vm798, %v805, 0.0
        %807 = vadd.xlane.f32.xlu0 %v806
        %v808 = vpop.xlane.xlu0 %807
        %v809 = vmul.f32 %v808, %v802
        %v810 = vadd.f32 %v809, 1e-05
        %v811 = vrsqrt.pop %v810
        %v812 = vmul.f32 %v804, %v811
        %v814 = vlaneseq
        %v815 = vshrl.u32 %v814, 7
        %v816 = vsub.s32 0, %v815
        %v817 = vrot.slane %v796, %v816
        %v819 = vmul.f32 %v812, %v817
        %v821 = vlaneseq
        %v822 = vshrl.u32 %v821, 7
        %v823 = vsub.s32 0, %v822
        %v824 = vrot.slane %v797, %v823
        %v826 = vadd.f32 %v819, %v824
        %v827 = vpack.c.bf16 %v826, %v826
        %v828 = vld [vmem:[%s3] sm:$0xf]
        %v829 = vld [vmem:[%s3 + $0x4] sm:$0xf]
        %v830 = vld [vmem:[%s3 + $0x8] sm:$0xf]
        %v831 = vld [vmem:[%s3 + $0xc] sm:$0xf]
        %v832 = vld [vmem:[#allocation7] sm:$0x1]
        %v834 = vlaneseq
        %v835 = vshrl.u32 %v834, 7
        %v836 = vsub.s32 0, %v835
        %v837 = vrot.slane %v832, %v836
        %v843 = vunpack.c.l.b16 %v828
        %v844 = vunpack.c.l.b16 %v829
        %v845 = vunpack.c.l.b16 %v830
        %v846 = vunpack.c.l.b16 %v831
        %v847 = vpack.c.b16 %v844, %v843
        %v848 = vpack.c.b16 %v846, %v845
        %v852 = vsel %vm798, %v827, 0
        %854 = vmatprep.subr.bf16.mxu0 0
        %855 = vmatpush1.bf16.msra.mxu0 %v847
        %856 = vmatprep.subr.bf16.mxu0 0
        %857 = vmatpush1.bf16.msra.mxu0 %v848
        %858 = vmatprep.subr.bf16.mxu0 0
        %859 = vmatpush1.bf16.msra.mxu0 0
        %860 = vmatprep.subr.bf16.mxu0 0
        %861 = vmatpush1.bf16.msra.mxu0 0
        %862 = vmatprep.subr.bf16.mxu0 0
        %863 = vmatpush1.bf16.msra.mxu0 0
        %864 = vmatprep.subr.bf16.mxu0 0
        %865 = vmatpush1.bf16.msra.mxu0 0
        %866 = vmatprep.subr.bf16.mxu0 0
        %867 = vmatpush1.bf16.msra.mxu0 0
        %868 = vmatprep.subr.bf16.mxu0 0
        %869 = vmatpush1.bf16.msra.mxu0 0
        %870 = vmatprep.subr.bf16.mxu0 0
        %871 = vmatpush1.bf16.msra.mxu0 0
        %872 = vmatprep.subr.bf16.mxu0 0
        %873 = vmatpush1.bf16.msra.mxu0 0
        %874 = vmatprep.subr.bf16.mxu0 0
        %875 = vmatpush1.bf16.msra.mxu0 0
        %876 = vmatprep.subr.bf16.mxu0 0
        %877 = vmatpush1.bf16.msra.mxu0 0
        %878 = vmatprep.subr.bf16.mxu0 0
        %879 = vmatpush1.bf16.msra.mxu0 0
        %880 = vmatprep.subr.bf16.mxu0 0
        %881 = vmatpush1.bf16.msra.mxu0 0
        %882 = vmatprep.subr.bf16.mxu0 0
        %883 = vmatpush1.bf16.msra.mxu0 0
        %884 = vmatprep.subr.bf16.mxu0 0
        %885 = vmatpush1.bf16.msra.mxu0 0
        %886 = vmatprep.mubr.bf16.mxu0 0
        %887 = vmatmul.mubr.bf16.gmra.mrb[0].mxu0 %v852
        %v888 = vpop.f32.mrb[0].mxu0
        %v889 = vadd.f32 %v837, %v888
        %v890 = vpop.f32.mrb[0].mxu0
        %v891 = vpop.f32.mrb[0].mxu0
        %v892 = vpop.f32.mrb[0].mxu0
        %893 = vdwg.mxu0
        %895 = vrot.lane.b32.xlu0 %v889, 120
        %v896 = vpop.permute.xlu0 %895
        %898 = vrot.lane.b32.xlu0 %v889, 112
        %v899 = vpop.permute.xlu0 %898
        %901 = vrot.lane.b32.xlu0 %v889, 104
        %v902 = vpop.permute.xlu0 %901
        %v904 = vpack.c.bf16 %v889, %v889
        %v905 = vpack.c.bf16 %v896, %v896
        %v906 = vpack.c.bf16 %v899, %v899
        %v907 = vpack.c.bf16 %v902, %v902
        %909 = vrot.lane.b32.xlu0 %v904, 96
        %v910 = vpop.permute.xlu0 %909
        %vm911 = vcmask 64512
        %v913 = vsel %vm911, %v904, 0
        %v916 = vsel %vm911, %v910, 0
        %918 = vmatprep.subr.bf16.mxu0 0
        %919 = vmatpush1.bf16.xpose.msra.mxu0 %v916
        %920 = vmatprep.subr.bf16.mxu0 0
        %921 = vmatpush1.bf16.xpose.msra.mxu0 0
        %922 = vmatprep.subr.bf16.mxu0 0
        %923 = vmatpush1.bf16.xpose.msra.mxu0 0
        %924 = vmatprep.subr.bf16.mxu0 0
        %925 = vmatpush1.bf16.xpose.msra.mxu0 0
        %926 = vmatprep.subr.bf16.mxu0 0
        %927 = vmatpush1.bf16.xpose.msra.mxu0 0
        %928 = vmatprep.subr.bf16.mxu0 0
        %929 = vmatpush1.bf16.xpose.msra.mxu0 0
        %930 = vmatprep.subr.bf16.mxu0 0
        %931 = vmatpush1.bf16.xpose.msra.mxu0 0
        %932 = vmatprep.subr.bf16.mxu0 0
        %933 = vmatpush1.bf16.xpose.msra.mxu0 0
        %934 = vmatprep.subr.bf16.mxu0 0
        %935 = vmatpush1.bf16.xpose.msra.mxu0 0
        %936 = vmatprep.subr.bf16.mxu0 0
        %937 = vmatpush1.bf16.xpose.msra.mxu0 0
        %938 = vmatprep.subr.bf16.mxu0 0
        %939 = vmatpush1.bf16.xpose.msra.mxu0 0
        %940 = vmatprep.subr.bf16.mxu0 0
        %941 = vmatpush1.bf16.xpose.msra.mxu0 0
        %942 = vmatprep.subr.bf16.mxu0 0
        %943 = vmatpush1.bf16.xpose.msra.mxu0 0
        %944 = vmatprep.subr.bf16.mxu0 0
        %945 = vmatpush1.bf16.xpose.msra.mxu0 0
        %946 = vmatprep.subr.bf16.mxu0 0
        %947 = vmatpush1.bf16.xpose.msra.mxu0 0
        %948 = vmatprep.subr.bf16.mxu0 0
        %949 = vmatpush1.bf16.xpose.msra.mxu0 0
        %950 = vmatprep.mubr.bf16.mxu0 0
        %951 = vmatmul.mubr.bf16.gmra.mrb[0].mxu0 %v913
        %v952 = vpop.f32.mrb[0].mxu0
        %v953 = vadd.f32 0.0, %v952
        %v954 = vpop.f32.mrb[0].mxu0
        %v955 = vpop.f32.mrb[0].mxu0
        %v956 = vpop.f32.mrb[0].mxu0
        %957 = vdwg.mxu0
        %959 = vrot.lane.b32.xlu0 %v905, 96
        %v960 = vpop.permute.xlu0 %959
        %v962 = vsel %vm911, %v905, 0
        %v965 = vsel %vm911, %v960, 0
        %967 = vmatprep.subr.bf16.mxu0 0
        %968 = vmatpush1.bf16.xpose.msra.mxu0 %v965
        %969 = vmatprep.subr.bf16.mxu0 0
        %970 = vmatpush1.bf16.xpose.msra.mxu0 0
        %971 = vmatprep.subr.bf16.mxu0 0
        %972 = vmatpush1.bf16.xpose.msra.mxu0 0
        %973 = vmatprep.subr.bf16.mxu0 0
        %974 = vmatpush1.bf16.xpose.msra.mxu0 0
        %975 = vmatprep.subr.bf16.mxu0 0
        %976 = vmatpush1.bf16.xpose.msra.mxu0 0
        %977 = vmatprep.subr.bf16.mxu0 0
        %978 = vmatpush1.bf16.xpose.msra.mxu0 0
        %979 = vmatprep.subr.bf16.mxu0 0
        %980 = vmatpush1.bf16.xpose.msra.mxu0 0
        %981 = vmatprep.subr.bf16.mxu0 0
        %982 = vmatpush1.bf16.xpose.msra.mxu0 0
        %983 = vmatprep.subr.bf16.mxu0 0
        %984 = vmatpush1.bf16.xpose.msra.mxu0 0
        %985 = vmatprep.subr.bf16.mxu0 0
        %986 = vmatpush1.bf16.xpose.msra.mxu0 0
        %987 = vmatprep.subr.bf16.mxu0 0
        %988 = vmatpush1.bf16.xpose.msra.mxu0 0
        %989 = vmatprep.subr.bf16.mxu0 0
        %990 = vmatpush1.bf16.xpose.msra.mxu0 0
        %991 = vmatprep.subr.bf16.mxu0 0
        %992 = vmatpush1.bf16.xpose.msra.mxu0 0
        %993 = vmatprep.subr.bf16.mxu0 0
        %994 = vmatpush1.bf16.xpose.msra.mxu0 0
        %995 = vmatprep.subr.bf16.mxu0 0
        %996 = vmatpush1.bf16.xpose.msra.mxu0 0
        %997 = vmatprep.subr.bf16.mxu0 0
        %998 = vmatpush1.bf16.xpose.msra.mxu0 0
        %999 = vmatprep.mubr.bf16.mxu0 0
        %1000 = vmatmul.mubr.bf16.gmra.mrb[0].mxu0 %v962
        %v1001 = vpop.f32.mrb[0].mxu0
        %v1002 = vadd.f32 0.0, %v1001
        %v1003 = vpop.f32.mrb[0].mxu0
        %v1004 = vpop.f32.mrb[0].mxu0
        %v1005 = vpop.f32.mrb[0].mxu0
        %1006 = vdwg.mxu0
        %1008 = vrot.lane.b32.xlu0 %v906, 96
        %v1009 = vpop.permute.xlu0 %1008
        %v1011 = vsel %vm911, %v906, 0
        %v1014 = vsel %vm911, %v1009, 0
        %1016 = vmatprep.subr.bf16.mxu0 0
        %1017 = vmatpush1.bf16.xpose.msra.mxu0 %v1014
        %1018 = vmatprep.subr.bf16.mxu0 0
        %1019 = vmatpush1.bf16.xpose.msra.mxu0 0
        %1020 = vmatprep.subr.bf16.mxu0 0
        %1021 = vmatpush1.bf16.xpose.msra.mxu0 0
        %1022 = vmatprep.subr.bf16.mxu0 0
        %1023 = vmatpush1.bf16.xpose.msra.mxu0 0
        %1024 = vmatprep.subr.bf16.mxu0 0
        %1025 = vmatpush1.bf16.xpose.msra.mxu0 0
        %1026 = vmatprep.subr.bf16.mxu0 0
        %1027 = vmatpush1.bf16.xpose.msra.mxu0 0
        %1028 = vmatprep.subr.bf16.mxu0 0
        %1029 = vmatpush1.bf16.xpose.msra.mxu0 0
        %1030 = vmatprep.subr.bf16.mxu0 0
        %1031 = vmatpush1.bf16.xpose.msra.mxu0 0
        %1032 = vmatprep.subr.bf16.mxu0 0
        %1033 = vmatpush1.bf16.xpose.msra.mxu0 0
        %1034 = vmatprep.subr.bf16.mxu0 0
        %1035 = vmatpush1.bf16.xpose.msra.mxu0 0
        %1036 = vmatprep.subr.bf16.mxu0 0
        %1037 = vmatpush1.bf16.xpose.msra.mxu0 0
        %1038 = vmatprep.subr.bf16.mxu0 0
        %1039 = vmatpush1.bf16.xpose.msra.mxu0 0
        %1040 = vmatprep.subr.bf16.mxu0 0
        %1041 = vmatpush1.bf16.xpose.msra.mxu0 0
        %1042 = vmatprep.subr.bf16.mxu0 0
        %1043 = vmatpush1.bf16.xpose.msra.mxu0 0
        %1044 = vmatprep.subr.bf16.mxu0 0
        %1045 = vmatpush1.bf16.xpose.msra.mxu0 0
        %1046 = vmatprep.subr.bf16.mxu0 0
        %1047 = vmatpush1.bf16.xpose.msra.mxu0 0
        %1048 = vmatprep.mubr.bf16.mxu0 0
        %1049 = vmatmul.mubr.bf16.gmra.mrb[0].mxu0 %v1011
        %v1050 = vpop.f32.mrb[0].mxu0
        %v1051 = vadd.f32 0.0, %v1050
        %v1052 = vpop.f32.mrb[0].mxu0
        %v1053 = vpop.f32.mrb[0].mxu0
        %v1054 = vpop.f32.mrb[0].mxu0
        %1055 = vdwg.mxu0
        %1057 = vrot.lane.b32.xlu0 %v907, 96
        %v1058 = vpop.permute.xlu0 %1057
        %v1060 = vsel %vm911, %v907, 0
        %v1063 = vsel %vm911, %v1058, 0
        %1065 = vmatprep.subr.bf16.mxu0 0
        %1066 = vmatpush1.bf16.xpose.msra.mxu0 %v1063
        %1067 = vmatprep.subr.bf16.mxu0 0
        %1068 = vmatpush1.bf16.xpose.msra.mxu0 0
        %1069 = vmatprep.subr.bf16.mxu0 0
        %1070 = vmatpush1.bf16.xpose.msra.mxu0 0
        %1071 = vmatprep.subr.bf16.mxu0 0
        %1072 = vmatpush1.bf16.xpose.msra.mxu0 0
        %1073 = vmatprep.subr.bf16.mxu0 0
        %1074 = vmatpush1.bf16.xpose.msra.mxu0 0
        %1075 = vmatprep.subr.bf16.mxu0 0
        %1076 = vmatpush1.bf16.xpose.msra.mxu0 0
        %1077 = vmatprep.subr.bf16.mxu0 0
        %1078 = vmatpush1.bf16.xpose.msra.mxu0 0
        %1079 = vmatprep.subr.bf16.mxu0 0
        %1080 = vmatpush1.bf16.xpose.msra.mxu0 0
        %1081 = vmatprep.subr.bf16.mxu0 0
        %1082 = vmatpush1.bf16.xpose.msra.mxu0 0
        %1083 = vmatprep.subr.bf16.mxu0 0
        %1084 = vmatpush1.bf16.xpose.msra.mxu0 0
        %1085 = vmatprep.subr.bf16.mxu0 0
        %1086 = vmatpush1.bf16.xpose.msra.mxu0 0
        %1087 = vmatprep.subr.bf16.mxu0 0
        %1088 = vmatpush1.bf16.xpose.msra.mxu0 0
        %1089 = vmatprep.subr.bf16.mxu0 0
        %1090 = vmatpush1.bf16.xpose.msra.mxu0 0
        %1091 = vmatprep.subr.bf16.mxu0 0
        %1092 = vmatpush1.bf16.xpose.msra.mxu0 0
        %1093 = vmatprep.subr.bf16.mxu0 0
        %1094 = vmatpush1.bf16.xpose.msra.mxu0 0
        %1095 = vmatprep.subr.bf16.mxu0 0
        %1096 = vmatpush1.bf16.xpose.msra.mxu0 0
        %1097 = vmatprep.mubr.bf16.mxu0 0
        %1098 = vmatmul.mubr.bf16.gmra.mrb[0].mxu0 %v1060
        %v1099 = vpop.f32.mrb[0].mxu0
        %v1100 = vadd.f32 0.0, %v1099
        %v1101 = vpop.f32.mrb[0].mxu0
        %v1102 = vpop.f32.mrb[0].mxu0
        %v1103 = vpop.f32.mrb[0].mxu0
        %1104 = vdwg.mxu0
        %v1105 = vmul.f32 %v953, 0.35355338
        %v1106 = vmul.f32 %v1002, 0.35355338
        %v1107 = vmul.f32 %v1051, 0.35355338
        %v1108 = vmul.f32 %v1100, 0.35355338
        %v1109 = vsel %vm911, %v1105, -inf
        %1110 = vmax.xlane.f32.xlu0 %v1109
        %v1111 = vpop.xlane.xlu0 %1110
        %v1112 = vsel %vm911, %v1106, -inf
        %1113 = vmax.xlane.f32.xlu0 %v1112
        %v1114 = vpop.xlane.xlu0 %1113
        %v1115 = vsel %vm911, %v1107, -inf
        %1116 = vmax.xlane.f32.xlu0 %v1115
        %v1117 = vpop.xlane.xlu0 %1116
        %v1118 = vsel %vm911, %v1108, -inf
        %1119 = vmax.xlane.f32.xlu0 %v1118
        %v1120 = vpop.xlane.xlu0 %1119
        %v1121 = vsub.f32 %v1105, %v1111
        %v1122 = vsub.f32 %v1106, %v1114
        %v1123 = vsub.f32 %v1107, %v1117
        %v1124 = vsub.f32 %v1108, %v1120
        %v1125 = vmul.f32 %v1121, 1.442695
        %v1126 = vpow.pop %v1125
        %v1127 = vmul.f32 %v1122, 1.442695
        %v1128 = vpow.pop %v1127
        %v1129 = vmul.f32 %v1123, 1.442695
        %v1130 = vpow.pop %v1129
        %v1131 = vmul.f32 %v1124, 1.442695
        %v1132 = vpow.pop %v1131
        %v1133 = vsel %vm911, %v1126, 0.0
        %1134 = vadd.xlane.f32.xlu0 %v1133
        %v1135 = vpop.xlane.xlu0 %1134
        %v1136 = vsel %vm911, %v1128, 0.0
        %1137 = vadd.xlane.f32.xlu0 %v1136
        %v1138 = vpop.xlane.xlu0 %1137
        %v1139 = vsel %vm911, %v1130, 0.0
        %1140 = vadd.xlane.f32.xlu0 %v1139
        %v1141 = vpop.xlane.xlu0 %1140
        %v1142 = vsel %vm911, %v1132, 0.0
        %1143 = vadd.xlane.f32.xlu0 %v1142
        %v1144 = vpop.xlane.xlu0 %1143
        %v1145 = vrcp.pop %v1135
        %v1146 = vrcp.pop %v1138
        %v1147 = vrcp.pop %v1141
        %v1148 = vrcp.pop %v1144
        %v1149 = vmul.f32 %v1126, %v1145
        %v1150 = vmul.f32 %v1128, %v1146
        %v1151 = vmul.f32 %v1130, %v1147
        %v1152 = vmul.f32 %v1132, %v1148
        %v1153 = vpack.c.bf16 %v1149, %v1149
        %v1154 = vpack.c.bf16 %v1150, %v1150
        %v1155 = vpack.c.bf16 %v1151, %v1151
        %v1156 = vpack.c.bf16 %v1152, %v1152
        %1157 = vrot.lane.b32.xlu0 %v904, 64
        %v1158 = vpop.permute.xlu0 %1157
        %v1160 = vsel %vm911, %v1153, 0
        %vm1162 = vcmask 1043456
        %v1164 = vsel %vm1162, %v1158, 0
        %1166 = vmatprep.subr.bf16.mxu0 0
        %1167 = vmatpush1.bf16.msra.mxu0 %v1164
        %1168 = vmatprep.subr.bf16.mxu0 0
        %1169 = vmatpush1.bf16.msra.mxu0 0
        %1170 = vmatprep.subr.bf16.mxu0 0
        %1171 = vmatpush1.bf16.msra.mxu0 0
        %1172 = vmatprep.subr.bf16.mxu0 0
        %1173 = vmatpush1.bf16.msra.mxu0 0
        %1174 = vmatprep.subr.bf16.mxu0 0
        %1175 = vmatpush1.bf16.msra.mxu0 0
        %1176 = vmatprep.subr.bf16.mxu0 0
        %1177 = vmatpush1.bf16.msra.mxu0 0
        %1178 = vmatprep.subr.bf16.mxu0 0
        %1179 = vmatpush1.bf16.msra.mxu0 0
        %1180 = vmatprep.subr.bf16.mxu0 0
        %1181 = vmatpush1.bf16.msra.mxu0 0
        %1182 = vmatprep.subr.bf16.mxu0 0
        %1183 = vmatpush1.bf16.msra.mxu0 0
        %1184 = vmatprep.subr.bf16.mxu0 0
        %1185 = vmatpush1.bf16.msra.mxu0 0
        %1186 = vmatprep.subr.bf16.mxu0 0
        %1187 = vmatpush1.bf16.msra.mxu0 0
        %1188 = vmatprep.subr.bf16.mxu0 0
        %1189 = vmatpush1.bf16.msra.mxu0 0
        %1190 = vmatprep.subr.bf16.mxu0 0
        %1191 = vmatpush1.bf16.msra.mxu0 0
        %1192 = vmatprep.subr.bf16.mxu0 0
        %1193 = vmatpush1.bf16.msra.mxu0 0
        %1194 = vmatprep.subr.bf16.mxu0 0
        %1195 = vmatpush1.bf16.msra.mxu0 0
        %1196 = vmatprep.subr.bf16.mxu0 0
        %1197 = vmatpush1.bf16.msra.mxu0 0
        %1198 = vmatprep.mubr.bf16.mxu0 0
        %1199 = vmatmul.mubr.bf16.gmra.mrb[0].mxu0 %v1160
        %v1200 = vpop.f32.mrb[0].mxu0
        %v1201 = vadd.f32 0.0, %v1200
        %v1202 = vpop.f32.mrb[0].mxu0
        %v1203 = vpop.f32.mrb[0].mxu0
        %v1204 = vpop.f32.mrb[0].mxu0
        %1205 = vdwg.mxu0
        %1206 = vrot.lane.b32.xlu0 %v905, 64
        %v1207 = vpop.permute.xlu0 %1206
        %v1209 = vsel %vm911, %v1154, 0
        %v1212 = vsel %vm1162, %v1207, 0
        %1214 = vmatprep.subr.bf16.mxu0 0
        %1215 = vmatpush1.bf16.msra.mxu0 %v1212
        %1216 = vmatprep.subr.bf16.mxu0 0
        %1217 = vmatpush1.bf16.msra.mxu0 0
        %1218 = vmatprep.subr.bf16.mxu0 0
        %1219 = vmatpush1.bf16.msra.mxu0 0
        %1220 = vmatprep.subr.bf16.mxu0 0
        %1221 = vmatpush1.bf16.msra.mxu0 0
        %1222 = vmatprep.subr.bf16.mxu0 0
        %1223 = vmatpush1.bf16.msra.mxu0 0
        %1224 = vmatprep.subr.bf16.mxu0 0
        %1225 = vmatpush1.bf16.msra.mxu0 0
        %1226 = vmatprep.subr.bf16.mxu0 0
        %1227 = vmatpush1.bf16.msra.mxu0 0
        %1228 = vmatprep.subr.bf16.mxu0 0
        %1229 = vmatpush1.bf16.msra.mxu0 0
        %1230 = vmatprep.subr.bf16.mxu0 0
        %1231 = vmatpush1.bf16.msra.mxu0 0
        %1232 = vmatprep.subr.bf16.mxu0 0
        %1233 = vmatpush1.bf16.msra.mxu0 0
        %1234 = vmatprep.subr.bf16.mxu0 0
        %1235 = vmatpush1.bf16.msra.mxu0 0
        %1236 = vmatprep.subr.bf16.mxu0 0
        %1237 = vmatpush1.bf16.msra.mxu0 0
        %1238 = vmatprep.subr.bf16.mxu0 0
        %1239 = vmatpush1.bf16.msra.mxu0 0
        %1240 = vmatprep.subr.bf16.mxu0 0
        %1241 = vmatpush1.bf16.msra.mxu0 0
        %1242 = vmatprep.subr.bf16.mxu0 0
        %1243 = vmatpush1.bf16.msra.mxu0 0
        %1244 = vmatprep.subr.bf16.mxu0 0
        %1245 = vmatpush1.bf16.msra.mxu0 0
        %1246 = vmatprep.mubr.bf16.mxu0 0
        %1247 = vmatmul.mubr.bf16.gmra.mrb[0].mxu0 %v1209
        %v1248 = vpop.f32.mrb[0].mxu0
        %v1249 = vadd.f32 0.0, %v1248
        %v1250 = vpop.f32.mrb[0].mxu0
        %v1251 = vpop.f32.mrb[0].mxu0
        %v1252 = vpop.f32.mrb[0].mxu0
        %1253 = vdwg.mxu0
        %1254 = vrot.lane.b32.xlu0 %v906, 64
        %v1255 = vpop.permute.xlu0 %1254
        %v1257 = vsel %vm911, %v1155, 0
        %v1260 = vsel %vm1162, %v1255, 0
        %1262 = vmatprep.subr.bf16.mxu0 0
        %1263 = vmatpush1.bf16.msra.mxu0 %v1260
        %1264 = vmatprep.subr.bf16.mxu0 0
        %1265 = vmatpush1.bf16.msra.mxu0 0
        %1266 = vmatprep.subr.bf16.mxu0 0
        %1267 = vmatpush1.bf16.msra.mxu0 0
        %1268 = vmatprep.subr.bf16.mxu0 0
        %1269 = vmatpush1.bf16.msra.mxu0 0
        %1270 = vmatprep.subr.bf16.mxu0 0
        %1271 = vmatpush1.bf16.msra.mxu0 0
        %1272 = vmatprep.subr.bf16.mxu0 0
        %1273 = vmatpush1.bf16.msra.mxu0 0
        %1274 = vmatprep.subr.bf16.mxu0 0
        %1275 = vmatpush1.bf16.msra.mxu0 0
        %1276 = vmatprep.subr.bf16.mxu0 0
        %1277 = vmatpush1.bf16.msra.mxu0 0
        %1278 = vmatprep.subr.bf16.mxu0 0
        %1279 = vmatpush1.bf16.msra.mxu0 0
        %1280 = vmatprep.subr.bf16.mxu0 0
        %1281 = vmatpush1.bf16.msra.mxu0 0
        %1282 = vmatprep.subr.bf16.mxu0 0
        %1283 = vmatpush1.bf16.msra.mxu0 0
        %1284 = vmatprep.subr.bf16.mxu0 0
        %1285 = vmatpush1.bf16.msra.mxu0 0
        %1286 = vmatprep.subr.bf16.mxu0 0
        %1287 = vmatpush1.bf16.msra.mxu0 0
        %1288 = vmatprep.subr.bf16.mxu0 0
        %1289 = vmatpush1.bf16.msra.mxu0 0
        %1290 = vmatprep.subr.bf16.mxu0 0
        %1291 = vmatpush1.bf16.msra.mxu0 0
        %1292 = vmatprep.subr.bf16.mxu0 0
        %1293 = vmatpush1.bf16.msra.mxu0 0
        %1294 = vmatprep.mubr.bf16.mxu0 0
        %1295 = vmatmul.mubr.bf16.gmra.mrb[0].mxu0 %v1257
        %v1296 = vpop.f32.mrb[0].mxu0
        %v1297 = vadd.f32 0.0, %v1296
        %v1298 = vpop.f32.mrb[0].mxu0
        %v1299 = vpop.f32.mrb[0].mxu0
        %v1300 = vpop.f32.mrb[0].mxu0
        %1301 = vdwg.mxu0
        %1302 = vrot.lane.b32.xlu0 %v907, 64
        %v1303 = vpop.permute.xlu0 %1302
        %v1305 = vsel %vm911, %v1156, 0
        %v1308 = vsel %vm1162, %v1303, 0
        %1310 = vmatprep.subr.bf16.mxu0 0
        %1311 = vmatpush1.bf16.msra.mxu0 %v1308
        %1312 = vmatprep.subr.bf16.mxu0 0
        %1313 = vmatpush1.bf16.msra.mxu0 0
        %1314 = vmatprep.subr.bf16.mxu0 0
        %1315 = vmatpush1.bf16.msra.mxu0 0
        %1316 = vmatprep.subr.bf16.mxu0 0
        %1317 = vmatpush1.bf16.msra.mxu0 0
        %1318 = vmatprep.subr.bf16.mxu0 0
        %1319 = vmatpush1.bf16.msra.mxu0 0
        %1320 = vmatprep.subr.bf16.mxu0 0
        %1321 = vmatpush1.bf16.msra.mxu0 0
        %1322 = vmatprep.subr.bf16.mxu0 0
        %1323 = vmatpush1.bf16.msra.mxu0 0
        %1324 = vmatprep.subr.bf16.mxu0 0
        %1325 = vmatpush1.bf16.msra.mxu0 0
        %1326 = vmatprep.subr.bf16.mxu0 0
        %1327 = vmatpush1.bf16.msra.mxu0 0
        %1328 = vmatprep.subr.bf16.mxu0 0
        %1329 = vmatpush1.bf16.msra.mxu0 0
        %1330 = vmatprep.subr.bf16.mxu0 0
        %1331 = vmatpush1.bf16.msra.mxu0 0
        %1332 = vmatprep.subr.bf16.mxu0 0
        %1333 = vmatpush1.bf16.msra.mxu0 0
        %1334 = vmatprep.subr.bf16.mxu0 0
        %1335 = vmatpush1.bf16.msra.mxu0 0
        %1336 = vmatprep.subr.bf16.mxu0 0
        %1337 = vmatpush1.bf16.msra.mxu0 0
        %1338 = vmatprep.subr.bf16.mxu0 0
        %1339 = vmatpush1.bf16.msra.mxu0 0
        %1340 = vmatprep.subr.bf16.mxu0 0
        %1341 = vmatpush1.bf16.msra.mxu0 0
        %1342 = vmatprep.mubr.bf16.mxu0 0
        %1343 = vmatmul.mubr.bf16.gmra.mrb[0].mxu0 %v1305
        %v1344 = vpop.f32.mrb[0].mxu0
        %v1345 = vadd.f32 0.0, %v1344
        %v1346 = vpop.f32.mrb[0].mxu0
        %v1347 = vpop.f32.mrb[0].mxu0
        %v1348 = vpop.f32.mrb[0].mxu0
        %1349 = vdwg.mxu0
        %v1350 = vpack.c.bf16 %v1201, %v1201
        %v1351 = vld [vmem:[%s5] sm:$0xf]
        %v1352 = vpack.c.bf16 %v1249, %v1249
        %s1353 = scalar_lea.vmem %s5, 4
        %v1354 = vld [vmem:[%s1353] sm:$0xf]
        %v1356 = vsel %vm911, %v1352, 0
        %v1359 = vsel %vm1162, %v1354, 0
        %1361 = vmatprep.subr.bf16.mxu0 0
        %1362 = vmatpush1.bf16.msra.mxu0 %v1359
        %1363 = vmatprep.subr.bf16.mxu0 0
        %1364 = vmatpush1.bf16.msra.mxu0 0
        %1365 = vmatprep.subr.bf16.mxu0 0
        %1366 = vmatpush1.bf16.msra.mxu0 0
        %1367 = vmatprep.subr.bf16.mxu0 0
        %1368 = vmatpush1.bf16.msra.mxu0 0
        %1369 = vmatprep.subr.bf16.mxu0 0
        %1370 = vmatpush1.bf16.msra.mxu0 0
        %1371 = vmatprep.subr.bf16.mxu0 0
        %1372 = vmatpush1.bf16.msra.mxu0 0
        %1373 = vmatprep.subr.bf16.mxu0 0
        %1374 = vmatpush1.bf16.msra.mxu0 0
        %1375 = vmatprep.subr.bf16.mxu0 0
        %1376 = vmatpush1.bf16.msra.mxu0 0
        %1377 = vmatprep.subr.bf16.mxu0 0
        %1378 = vmatpush1.bf16.msra.mxu0 0
        %1379 = vmatprep.subr.bf16.mxu0 0
        %1380 = vmatpush1.bf16.msra.mxu0 0
        %1381 = vmatprep.subr.bf16.mxu0 0
        %1382 = vmatpush1.bf16.msra.mxu0 0
        %1383 = vmatprep.subr.bf16.mxu0 0
        %1384 = vmatpush1.bf16.msra.mxu0 0
        %1385 = vmatprep.subr.bf16.mxu0 0
        %1386 = vmatpush1.bf16.msra.mxu0 0
        %1387 = vmatprep.subr.bf16.mxu0 0
        %1388 = vmatpush1.bf16.msra.mxu0 0
        %1389 = vmatprep.subr.bf16.mxu0 0
        %1390 = vmatpush1.bf16.msra.mxu0 0
        %1391 = vmatprep.subr.bf16.mxu0 0
        %1392 = vmatpush1.bf16.msra.mxu0 0
        %1393 = vmatprep.mubr.bf16.mxu0 0
        %1394 = vmatmul.mubr.bf16.gmra.mrb[0].mxu0 %v1356
        %v1395 = vpop.f32.mrb[0].mxu0
        %v1396 = vadd.f32 0.0, %v1395
        %v1397 = vpop.f32.mrb[0].mxu0
        %v1398 = vpop.f32.mrb[0].mxu0
        %v1399 = vpop.f32.mrb[0].mxu0
        %1400 = vdwg.mxu0
        %v1402 = vsel %vm911, %v1350, 0
        %v1405 = vsel %vm1162, %v1351, 0
        %1407 = vmatprep.subr.bf16.mxu0 0
        %1408 = vmatpush1.bf16.msra.mxu0 %v1405
        %1409 = vmatprep.subr.bf16.mxu0 0
        %1410 = vmatpush1.bf16.msra.mxu0 0
        %1411 = vmatprep.subr.bf16.mxu0 0
        %1412 = vmatpush1.bf16.msra.mxu0 0
        %1413 = vmatprep.subr.bf16.mxu0 0
        %1414 = vmatpush1.bf16.msra.mxu0 0
        %1415 = vmatprep.subr.bf16.mxu0 0
        %1416 = vmatpush1.bf16.msra.mxu0 0
        %1417 = vmatprep.subr.bf16.mxu0 0
        %1418 = vmatpush1.bf16.msra.mxu0 0
        %1419 = vmatprep.subr.bf16.mxu0 0
        %1420 = vmatpush1.bf16.msra.mxu0 0
        %1421 = vmatprep.subr.bf16.mxu0 0
        %1422 = vmatpush1.bf16.msra.mxu0 0
        %1423 = vmatprep.subr.bf16.mxu0 0
        %1424 = vmatpush1.bf16.msra.mxu0 0
        %1425 = vmatprep.subr.bf16.mxu0 0
        %1426 = vmatpush1.bf16.msra.mxu0 0
        %1427 = vmatprep.subr.bf16.mxu0 0
        %1428 = vmatpush1.bf16.msra.mxu0 0
        %1429 = vmatprep.subr.bf16.mxu0 0
        %1430 = vmatpush1.bf16.msra.mxu0 0
        %1431 = vmatprep.subr.bf16.mxu0 0
        %1432 = vmatpush1.bf16.msra.mxu0 0
        %1433 = vmatprep.subr.bf16.mxu0 0
        %1434 = vmatpush1.bf16.msra.mxu0 0
        %1435 = vmatprep.subr.bf16.mxu0 0
        %1436 = vmatpush1.bf16.msra.mxu0 0
        %1437 = vmatprep.subr.bf16.mxu0 0
        %1438 = vmatpush1.bf16.msra.mxu0 0
        %1439 = vmatprep.mubr.bf16.mxu0 0
        %1440 = vmatmul.mubr.bf16.gmra.mrb[0].mxu0 %v1402
        %v1441 = vpop.f32.mrb[0].mxu0
        %v1442 = vadd.f32 %v1396, %v1441
        %v1443 = vpop.f32.mrb[0].mxu0
        %v1444 = vpop.f32.mrb[0].mxu0
        %v1445 = vpop.f32.mrb[0].mxu0
        %1446 = vdwg.mxu0
        %v1447 = vpack.c.bf16 %v1297, %v1297
        %s1448 = scalar_lea.vmem %s5, 8
        %v1449 = vld [vmem:[%s1448] sm:$0xf]
        %v1451 = vsel %vm911, %v1447, 0
        %v1454 = vsel %vm1162, %v1449, 0
        %1456 = vmatprep.subr.bf16.mxu0 0
        %1457 = vmatpush1.bf16.msra.mxu0 %v1454
        %1458 = vmatprep.subr.bf16.mxu0 0
        %1459 = vmatpush1.bf16.msra.mxu0 0
        %1460 = vmatprep.subr.bf16.mxu0 0
        %1461 = vmatpush1.bf16.msra.mxu0 0
        %1462 = vmatprep.subr.bf16.mxu0 0
        %1463 = vmatpush1.bf16.msra.mxu0 0
        %1464 = vmatprep.subr.bf16.mxu0 0
        %1465 = vmatpush1.bf16.msra.mxu0 0
        %1466 = vmatprep.subr.bf16.mxu0 0
        %1467 = vmatpush1.bf16.msra.mxu0 0
        %1468 = vmatprep.subr.bf16.mxu0 0
        %1469 = vmatpush1.bf16.msra.mxu0 0
        %1470 = vmatprep.subr.bf16.mxu0 0
        %1471 = vmatpush1.bf16.msra.mxu0 0
        %1472 = vmatprep.subr.bf16.mxu0 0
        %1473 = vmatpush1.bf16.msra.mxu0 0
        %1474 = vmatprep.subr.bf16.mxu0 0
        %1475 = vmatpush1.bf16.msra.mxu0 0
        %1476 = vmatprep.subr.bf16.mxu0 0
        %1477 = vmatpush1.bf16.msra.mxu0 0
        %1478 = vmatprep.subr.bf16.mxu0 0
        %1479 = vmatpush1.bf16.msra.mxu0 0
        %1480 = vmatprep.subr.bf16.mxu0 0
        %1481 = vmatpush1.bf16.msra.mxu0 0
        %1482 = vmatprep.subr.bf16.mxu0 0
        %1483 = vmatpush1.bf16.msra.mxu0 0
        %1484 = vmatprep.subr.bf16.mxu0 0
        %1485 = vmatpush1.bf16.msra.mxu0 0
        %1486 = vmatprep.subr.bf16.mxu0 0
        %1487 = vmatpush1.bf16.msra.mxu0 0
        %1488 = vmatprep.mubr.bf16.mxu0 0
        %1489 = vmatmul.mubr.bf16.gmra.mrb[0].mxu0 %v1451
        %v1490 = vpop.f32.mrb[0].mxu0
        %v1491 = vadd.f32 0.0, %v1490
        %v1492 = vpop.f32.mrb[0].mxu0
        %v1493 = vpop.f32.mrb[0].mxu0
        %v1494 = vpop.f32.mrb[0].mxu0
        %1495 = vdwg.mxu0
        %v1496 = vadd.f32 %v1442, %v1491
        %v1497 = vpack.c.bf16 %v1345, %v1345
        %s1498 = scalar_lea.vmem %s5, 12
        %v1499 = vld [vmem:[%s1498] sm:$0xf]
        %v1501 = vsel %vm911, %v1497, 0
        %v1504 = vsel %vm1162, %v1499, 0
        %1506 = vmatprep.subr.bf16.mxu0 0
        %1507 = vmatpush1.bf16.msra.mxu0 %v1504
        %1508 = vmatprep.subr.bf16.mxu0 0
        %1509 = vmatpush1.bf16.msra.mxu0 0
        %1510 = vmatprep.subr.bf16.mxu0 0
        %1511 = vmatpush1.bf16.msra.mxu0 0
        %1512 = vmatprep.subr.bf16.mxu0 0
        %1513 = vmatpush1.bf16.msra.mxu0 0
        %1514 = vmatprep.subr.bf16.mxu0 0
        %1515 = vmatpush1.bf16.msra.mxu0 0
        %1516 = vmatprep.subr.bf16.mxu0 0
        %1517 = vmatpush1.bf16.msra.mxu0 0
        %1518 = vmatprep.subr.bf16.mxu0 0
        %1519 = vmatpush1.bf16.msra.mxu0 0
        %1520 = vmatprep.subr.bf16.mxu0 0
        %1521 = vmatpush1.bf16.msra.mxu0 0
        %1522 = vmatprep.subr.bf16.mxu0 0
        %1523 = vmatpush1.bf16.msra.mxu0 0
        %1524 = vmatprep.subr.bf16.mxu0 0
        %1525 = vmatpush1.bf16.msra.mxu0 0
        %1526 = vmatprep.subr.bf16.mxu0 0
        %1527 = vmatpush1.bf16.msra.mxu0 0
        %1528 = vmatprep.subr.bf16.mxu0 0
        %1529 = vmatpush1.bf16.msra.mxu0 0
        %1530 = vmatprep.subr.bf16.mxu0 0
        %1531 = vmatpush1.bf16.msra.mxu0 0
        %1532 = vmatprep.subr.bf16.mxu0 0
        %1533 = vmatpush1.bf16.msra.mxu0 0
        %1534 = vmatprep.subr.bf16.mxu0 0
        %1535 = vmatpush1.bf16.msra.mxu0 0
        %1536 = vmatprep.subr.bf16.mxu0 0
        %1537 = vmatpush1.bf16.msra.mxu0 0
        %1538 = vmatprep.mubr.bf16.mxu0 0
        %1539 = vmatmul.mubr.bf16.gmra.mrb[0].mxu0 %v1501
        %v1540 = vpop.f32.mrb[0].mxu0
        %v1541 = vadd.f32 0.0, %v1540
        %v1542 = vpop.f32.mrb[0].mxu0
        %v1543 = vpop.f32.mrb[0].mxu0
        %v1544 = vpop.f32.mrb[0].mxu0
        %1545 = vdwg.mxu0
        %v1546 = vadd.f32 %v1496, %v1541
        %v1547 = vld [vmem:[#allocation8] sm:$0x1]
        %v1549 = vlaneseq
        %v1550 = vshrl.u32 %v1549, 7
        %v1551 = vsub.s32 0, %v1550
        %v1552 = vrot.slane %v1547, %v1551
        %v1554 = vadd.f32 %v1546, %v1552
        %v1555 = vpack.c.bf16 %v795, %v795
        %v1556 = vld [vmem:[#allocation10] sm:$0xf]
        %v1557 = vld [vmem:[#allocation10 + $0x4] sm:$0xf]
        %v1558 = vld [vmem:[#allocation10 + $0x8] sm:$0xf]
        %v1559 = vld [vmem:[#allocation10 + $0xc] sm:$0xf]
        %v1560 = vpack.c.bf16 %v1554, %v1554
        %v1561 = vld [vmem:[#allocation11] sm:$0xf]
        %v1562 = vld [vmem:[#allocation11 + $0x4] sm:$0xf]
        %v1563 = vld [vmem:[#allocation11 + $0x8] sm:$0xf]
        %v1564 = vld [vmem:[#allocation11 + $0xc] sm:$0xf]
        %v1569 = vunpack.c.l.b16 %v1561
        %v1570 = vunpack.c.l.b16 %v1562
        %v1571 = vunpack.c.l.b16 %v1563
        %v1572 = vunpack.c.l.b16 %v1564
        %v1573 = vpack.c.b16 %v1570, %v1569
        %v1574 = vpack.c.b16 %v1572, %v1571
        %v1578 = vsel %vm798, %v1560, 0
        %1580 = vmatprep.subr.bf16.mxu0 0
        %1581 = vmatpush1.bf16.msra.mxu0 %v1573
        %1582 = vmatprep.subr.bf16.mxu0 0
        %1583 = vmatpush1.bf16.msra.mxu0 %v1574
        %1584 = vmatprep.subr.bf16.mxu0 0
        %1585 = vmatpush1.bf16.msra.mxu0 0
        %1586 = vmatprep.subr.bf16.mxu0 0
        %1587 = vmatpush1.bf16.msra.mxu0 0
        %1588 = vmatprep.subr.bf16.mxu0 0
        %1589 = vmatpush1.bf16.msra.mxu0 0
        %1590 = vmatprep.subr.bf16.mxu0 0
        %1591 = vmatpush1.bf16.msra.mxu0 0
        %1592 = vmatprep.subr.bf16.mxu0 0
        %1593 = vmatpush1.bf16.msra.mxu0 0
        %1594 = vmatprep.subr.bf16.mxu0 0
        %1595 = vmatpush1.bf16.msra.mxu0 0
        %1596 = vmatprep.subr.bf16.mxu0 0
        %1597 = vmatpush1.bf16.msra.mxu0 0
        %1598 = vmatprep.subr.bf16.mxu0 0
        %1599 = vmatpush1.bf16.msra.mxu0 0
        %1600 = vmatprep.subr.bf16.mxu0 0
        %1601 = vmatpush1.bf16.msra.mxu0 0
        %1602 = vmatprep.subr.bf16.mxu0 0
        %1603 = vmatpush1.bf16.msra.mxu0 0
        %1604 = vmatprep.subr.bf16.mxu0 0
        %1605 = vmatpush1.bf16.msra.mxu0 0
        %1606 = vmatprep.subr.bf16.mxu0 0
        %1607 = vmatpush1.bf16.msra.mxu0 0
        %1608 = vmatprep.subr.bf16.mxu0 0
        %1609 = vmatpush1.bf16.msra.mxu0 0
        %1610 = vmatprep.subr.bf16.mxu0 0
        %1611 = vmatpush1.bf16.msra.mxu0 0
        %1612 = vmatprep.mubr.bf16.mxu0 0
        %1613 = vmatmul.mubr.bf16.gmra.mrb[0].mxu0 %v1578
        %v1614 = vpop.f32.mrb[0].mxu0
        %v1615 = vadd.f32 0.0, %v1614
        %v1616 = vpop.f32.mrb[0].mxu0
        %v1617 = vpop.f32.mrb[0].mxu0
        %v1618 = vpop.f32.mrb[0].mxu0
        %1619 = vdwg.mxu0
        %v1624 = vunpack.c.l.b16 %v1556
        %v1625 = vunpack.c.l.b16 %v1557
        %v1626 = vunpack.c.l.b16 %v1558
        %v1627 = vunpack.c.l.b16 %v1559
        %v1628 = vpack.c.b16 %v1625, %v1624
        %v1629 = vpack.c.b16 %v1627, %v1626
        %v1633 = vsel %vm798, %v1555, 0
        %1635 = vmatprep.subr.bf16.mxu0 0
        %1636 = vmatpush1.bf16.msra.mxu0 %v1628
        %1637 = vmatprep.subr.bf16.mxu0 0
        %1638 = vmatpush1.bf16.msra.mxu0 %v1629
        %1639 = vmatprep.subr.bf16.mxu0 0
        %1640 = vmatpush1.bf16.msra.mxu0 0
        %1641 = vmatprep.subr.bf16.mxu0 0
        %1642 = vmatpush1.bf16.msra.mxu0 0
        %1643 = vmatprep.subr.bf16.mxu0 0
        %1644 = vmatpush1.bf16.msra.mxu0 0
        %1645 = vmatprep.subr.bf16.mxu0 0
        %1646 = vmatpush1.bf16.msra.mxu0 0
        %1647 = vmatprep.subr.bf16.mxu0 0
        %1648 = vmatpush1.bf16.msra.mxu0 0
        %1649 = vmatprep.subr.bf16.mxu0 0
        %1650 = vmatpush1.bf16.msra.mxu0 0
        %1651 = vmatprep.subr.bf16.mxu0 0
        %1652 = vmatpush1.bf16.msra.mxu0 0
        %1653 = vmatprep.subr.bf16.mxu0 0
        %1654 = vmatpush1.bf16.msra.mxu0 0
        %1655 = vmatprep.subr.bf16.mxu0 0
        %1656 = vmatpush1.bf16.msra.mxu0 0
        %1657 = vmatprep.subr.bf16.mxu0 0
        %1658 = vmatpush1.bf16.msra.mxu0 0
        %1659 = vmatprep.subr.bf16.mxu0 0
        %1660 = vmatpush1.bf16.msra.mxu0 0
        %1661 = vmatprep.subr.bf16.mxu0 0
        %1662 = vmatpush1.bf16.msra.mxu0 0
        %1663 = vmatprep.subr.bf16.mxu0 0
        %1664 = vmatpush1.bf16.msra.mxu0 0
        %1665 = vmatprep.subr.bf16.mxu0 0
        %1666 = vmatpush1.bf16.msra.mxu0 0
        %1667 = vmatprep.mubr.bf16.mxu0 0
        %1668 = vmatmul.mubr.bf16.gmra.mrb[0].mxu0 %v1633
        %v1669 = vpop.f32.mrb[0].mxu0
        %v1670 = vadd.f32 %v1615, %v1669
        %v1671 = vpop.f32.mrb[0].mxu0
        %v1672 = vpop.f32.mrb[0].mxu0
        %v1673 = vpop.f32.mrb[0].mxu0
        %1674 = vdwg.mxu0
        %v1675 = vld [vmem:[#allocation13] sm:$0x1]
        %v1677 = vlaneseq
        %v1678 = vshrl.u32 %v1677, 7
        %v1679 = vsub.s32 0, %v1678
        %v1680 = vrot.slane %v1675, %v1679
        %v1682 = vadd.f32 %v1670, %v1680
        %v1683 = vadd.f32 %v795, %v1682
        %v1684 = vld [vmem:[#allocation14] sm:$0x1]
        %v1685 = vld [vmem:[#allocation16] sm:$0x1]
        %v1686 = vsel %vm798, %v1683, 0.0
        %1687 = vadd.xlane.f32.xlu0 %v1686
        %v1688 = vpop.xlane.xlu0 %1687
        %v1689 = vmul.f32 %v1688, %v802
        %v1690 = vsub.f32 %v1683, %v1689
        %v1691 = vmul.f32 %v1690, %v1690
        %v1692 = vsel %vm798, %v1691, 0.0
        %1693 = vadd.xlane.f32.xlu0 %v1692
        %v1694 = vpop.xlane.xlu0 %1693
        %v1695 = vmul.f32 %v1694, %v802
        %v1696 = vadd.f32 %v1695, 1e-05
        %v1697 = vrsqrt.pop %v1696
        %v1698 = vmul.f32 %v1690, %v1697
        %v1700 = vlaneseq
        %v1701 = vshrl.u32 %v1700, 7
        %v1702 = vsub.s32 0, %v1701
        %v1703 = vrot.slane %v1684, %v1702
        %v1705 = vmul.f32 %v1698, %v1703
        %v1707 = vlaneseq
        %v1708 = vshrl.u32 %v1707, 7
        %v1709 = vsub.s32 0, %v1708
        %v1710 = vrot.slane %v1685, %v1709
        %v1712 = vadd.f32 %v1705, %v1710
        %v1713 = vpack.c.bf16 %v1712, %v1712
        %v1714 = vld [vmem:[%s12] sm:$0xf]
        %v1715 = vld [vmem:[%s12 + $0x4] sm:$0xf]
        %v1716 = vld [vmem:[%s12 + $0x8] sm:$0xf]
        %v1717 = vld [vmem:[%s12 + $0xc] sm:$0xf]
        %v1718 = vld [vmem:[#allocation17] sm:$0x1]
        %v1720 = vlaneseq
        %v1721 = vshrl.u32 %v1720, 7
        %v1722 = vsub.s32 0, %v1721
        %v1723 = vrot.slane %v1718, %v1722
        %v1729 = vunpack.c.l.b16 %v1714
        %v1730 = vunpack.c.l.b16 %v1715
        %v1731 = vunpack.c.l.b16 %v1716
        %v1732 = vunpack.c.l.b16 %v1717
        %v1733 = vpack.c.b16 %v1730, %v1729
        %v1734 = vpack.c.b16 %v1732, %v1731
        %v1738 = vsel %vm798, %v1713, 0
        %1740 = vmatprep.subr.bf16.mxu0 0
        %1741 = vmatpush1.bf16.msra.mxu0 %v1733
        %1742 = vmatprep.subr.bf16.mxu0 0
        %1743 = vmatpush1.bf16.msra.mxu0 %v1734
        %1744 = vmatprep.subr.bf16.mxu0 0
        %1745 = vmatpush1.bf16.msra.mxu0 0
        %1746 = vmatprep.subr.bf16.mxu0 0
        %1747 = vmatpush1.bf16.msra.mxu0 0
        %1748 = vmatprep.subr.bf16.mxu0 0
        %1749 = vmatpush1.bf16.msra.mxu0 0
        %1750 = vmatprep.subr.bf16.mxu0 0
        %1751 = vmatpush1.bf16.msra.mxu0 0
        %1752 = vmatprep.subr.bf16.mxu0 0
        %1753 = vmatpush1.bf16.msra.mxu0 0
        %1754 = vmatprep.subr.bf16.mxu0 0
        %1755 = vmatpush1.bf16.msra.mxu0 0
        %1756 = vmatprep.subr.bf16.mxu0 0
        %1757 = vmatpush1.bf16.msra.mxu0 0
        %1758 = vmatprep.subr.bf16.mxu0 0
        %1759 = vmatpush1.bf16.msra.mxu0 0
        %1760 = vmatprep.subr.bf16.mxu0 0
        %1761 = vmatpush1.bf16.msra.mxu0 0
        %1762 = vmatprep.subr.bf16.mxu0 0
        %1763 = vmatpush1.bf16.msra.mxu0 0
        %1764 = vmatprep.subr.bf16.mxu0 0
        %1765 = vmatpush1.bf16.msra.mxu0 0
        %1766 = vmatprep.subr.bf16.mxu0 0
        %1767 = vmatpush1.bf16.msra.mxu0 0
        %1768 = vmatprep.subr.bf16.mxu0 0
        %1769 = vmatpush1.bf16.msra.mxu0 0
        %1770 = vmatprep.subr.bf16.mxu0 0
        %1771 = vmatpush1.bf16.msra.mxu0 0
        %1772 = vmatprep.mubr.bf16.mxu0 0
        %1773 = vmatmul.mubr.bf16.gmra.mrb[0].mxu0 %v1738
        %v1774 = vpop.f32.mrb[0].mxu0
        %v1775 = vadd.f32 %v1723, %v1774
        %v1776 = vpop.f32.mrb[0].mxu0
        %v1777 = vpop.f32.mrb[0].mxu0
        %v1778 = vpop.f32.mrb[0].mxu0
        %1779 = vdwg.mxu0
        %v1780 = vmax.f32 %v1775, 0.0
        %v1781 = vpack.c.bf16 %v1780, %v1780
        %v1782 = vld [vmem:[%s14] sm:$0xf]
        %v1783 = vld [vmem:[%s14 + $0x4] sm:$0xf]
        %v1784 = vld [vmem:[%s14 + $0x8] sm:$0xf]
        %v1785 = vld [vmem:[%s14 + $0xc] sm:$0xf]
        %v1786 = vld [vmem:[%s14 + $0x10] sm:$0xf]
        %v1787 = vld [vmem:[%s14 + $0x14] sm:$0xf]
        %v1788 = vld [vmem:[%s14 + $0x18] sm:$0xf]
        %v1789 = vld [vmem:[%s14 + $0x1c] sm:$0xf]
        %v1790 = vld [vmem:[#allocation19] sm:$0x1]
        %v1792 = vlaneseq
        %v1793 = vshrl.u32 %v1792, 7
        %v1794 = vsub.s32 0, %v1793
        %v1795 = vrot.slane %v1790, %v1794
        %v1805 = vunpack.c.l.b16 %v1782
        %v1806 = vunpack.c.l.b16 %v1783
        %v1807 = vunpack.c.l.b16 %v1784
        %v1808 = vunpack.c.l.b16 %v1785
        %v1809 = vunpack.c.l.b16 %v1786
        %v1810 = vunpack.c.l.b16 %v1787
        %v1811 = vunpack.c.l.b16 %v1788
        %v1812 = vunpack.c.l.b16 %v1789
        %v1813 = vpack.c.b16 %v1806, %v1805
        %v1814 = vpack.c.b16 %v1808, %v1807
        %v1815 = vpack.c.b16 %v1810, %v1809
        %v1816 = vpack.c.b16 %v1812, %v1811
        %vm1821 = vcmask 523264
        %v1823 = vsel %vm1821, %v1781, 0
        %1825 = vmatprep.subr.bf16.mxu0 0
        %1826 = vmatpush1.bf16.msra.mxu0 %v1813
        %1827 = vmatprep.subr.bf16.mxu0 0
        %1828 = vmatpush1.bf16.msra.mxu0 %v1814
        %1829 = vmatprep.subr.bf16.mxu0 0
        %1830 = vmatpush1.bf16.msra.mxu0 %v1815
        %1831 = vmatprep.subr.bf16.mxu0 0
        %1832 = vmatpush1.bf16.msra.mxu0 %v1816
        %1833 = vmatprep.subr.bf16.mxu0 0
        %1834 = vmatpush1.bf16.msra.mxu0 0
        %1835 = vmatprep.subr.bf16.mxu0 0
        %1836 = vmatpush1.bf16.msra.mxu0 0
        %1837 = vmatprep.subr.bf16.mxu0 0
        %1838 = vmatpush1.bf16.msra.mxu0 0
        %1839 = vmatprep.subr.bf16.mxu0 0
        %1840 = vmatpush1.bf16.msra.mxu0 0
        %1841 = vmatprep.subr.bf16.mxu0 0
        %1842 = vmatpush1.bf16.msra.mxu0 0
        %1843 = vmatprep.subr.bf16.mxu0 0
        %1844 = vmatpush1.bf16.msra.mxu0 0
        %1845 = vmatprep.subr.bf16.mxu0 0
        %1846 = vmatpush1.bf16.msra.mxu0 0
        %1847 = vmatprep.subr.bf16.mxu0 0
        %1848 = vmatpush1.bf16.msra.mxu0 0
        %1849 = vmatprep.subr.bf16.mxu0 0
        %1850 = vmatpush1.bf16.msra.mxu0 0
        %1851 = vmatprep.subr.bf16.mxu0 0
        %1852 = vmatpush1.bf16.msra.mxu0 0
        %1853 = vmatprep.subr.bf16.mxu0 0
        %1854 = vmatpush1.bf16.msra.mxu0 0
        %1855 = vmatprep.subr.bf16.mxu0 0
        %1856 = vmatpush1.bf16.msra.mxu0 0
        %1857 = vmatprep.mubr.bf16.mxu0 0
        %1858 = vmatmul.mubr.bf16.gmra.mrb[0].mxu0 %v1823
        %v1859 = vpop.f32.mrb[0].mxu0
        %v1860 = vadd.f32 %v1795, %v1859
        %v1861 = vpop.f32.mrb[0].mxu0
        %v1862 = vpop.f32.mrb[0].mxu0
        %v1863 = vpop.f32.mrb[0].mxu0
        %1864 = vdwg.mxu0
        %v1865 = vpack.c.bf16 %v1683, %v1683
        %v1866 = vld [vmem:[%s16] sm:$0xf]
        %v1867 = vld [vmem:[%s16 + $0x4] sm:$0xf]
        %v1868 = vld [vmem:[%s16 + $0x8] sm:$0xf]
        %v1869 = vld [vmem:[%s16 + $0xc] sm:$0xf]
        %v1870 = vpack.c.bf16 %v1860, %v1860
        %v1871 = vld [vmem:[%s17] sm:$0xf]
        %v1872 = vld [vmem:[%s17 + $0x4] sm:$0xf]
        %v1873 = vld [vmem:[%s17 + $0x8] sm:$0xf]
        %v1874 = vld [vmem:[%s17 + $0xc] sm:$0xf]
        %v1879 = vunpack.c.l.b16 %v1871
        %v1880 = vunpack.c.l.b16 %v1872
        %v1881 = vunpack.c.l.b16 %v1873
        %v1882 = vunpack.c.l.b16 %v1874
        %v1883 = vpack.c.b16 %v1880, %v1879
        %v1884 = vpack.c.b16 %v1882, %v1881
        %v1888 = vsel %vm798, %v1870, 0
        %1890 = vmatprep.subr.bf16.mxu0 0
        %1891 = vmatpush1.bf16.msra.mxu0 %v1883
        %1892 = vmatprep.subr.bf16.mxu0 0
        %1893 = vmatpush1.bf16.msra.mxu0 %v1884
        %1894 = vmatprep.subr.bf16.mxu0 0
        %1895 = vmatpush1.bf16.msra.mxu0 0
        %1896 = vmatprep.subr.bf16.mxu0 0
        %1897 = vmatpush1.bf16.msra.mxu0 0
        %1898 = vmatprep.subr.bf16.mxu0 0
        %1899 = vmatpush1.bf16.msra.mxu0 0
        %1900 = vmatprep.subr.bf16.mxu0 0
        %1901 = vmatpush1.bf16.msra.mxu0 0
        %1902 = vmatprep.subr.bf16.mxu0 0
        %1903 = vmatpush1.bf16.msra.mxu0 0
        %1904 = vmatprep.subr.bf16.mxu0 0
        %1905 = vmatpush1.bf16.msra.mxu0 0
        %1906 = vmatprep.subr.bf16.mxu0 0
        %1907 = vmatpush1.bf16.msra.mxu0 0
        %1908 = vmatprep.subr.bf16.mxu0 0
        %1909 = vmatpush1.bf16.msra.mxu0 0
        %1910 = vmatprep.subr.bf16.mxu0 0
        %1911 = vmatpush1.bf16.msra.mxu0 0
        %1912 = vmatprep.subr.bf16.mxu0 0
        %1913 = vmatpush1.bf16.msra.mxu0 0
        %1914 = vmatprep.subr.bf16.mxu0 0
        %1915 = vmatpush1.bf16.msra.mxu0 0
        %1916 = vmatprep.subr.bf16.mxu0 0
        %1917 = vmatpush1.bf16.msra.mxu0 0
        %1918 = vmatprep.subr.bf16.mxu0 0
        %1919 = vmatpush1.bf16.msra.mxu0 0
        %1920 = vmatprep.subr.bf16.mxu0 0
        %1921 = vmatpush1.bf16.msra.mxu0 0
        %1922 = vmatprep.mubr.bf16.mxu0 0
        %1923 = vmatmul.mubr.bf16.gmra.mrb[0].mxu0 %v1888
        %v1924 = vpop.f32.mrb[0].mxu0
        %v1925 = vadd.f32 0.0, %v1924
        %v1926 = vpop.f32.mrb[0].mxu0
        %v1927 = vpop.f32.mrb[0].mxu0
        %v1928 = vpop.f32.mrb[0].mxu0
        %1929 = vdwg.mxu0
        %v1934 = vunpack.c.l.b16 %v1866
        %v1935 = vunpack.c.l.b16 %v1867
        %v1936 = vunpack.c.l.b16 %v1868
        %v1937 = vunpack.c.l.b16 %v1869
        %v1938 = vpack.c.b16 %v1935, %v1934
        %v1939 = vpack.c.b16 %v1937, %v1936
        %v1943 = vsel %vm798, %v1865, 0
        %1945 = vmatprep.subr.bf16.mxu0 0
        %1946 = vmatpush1.bf16.msra.mxu0 %v1938
        %1947 = vmatprep.subr.bf16.mxu0 0
        %1948 = vmatpush1.bf16.msra.mxu0 %v1939
        %1949 = vmatprep.subr.bf16.mxu0 0
        %1950 = vmatpush1.bf16.msra.mxu0 0
        %1951 = vmatprep.subr.bf16.mxu0 0
        %1952 = vmatpush1.bf16.msra.mxu0 0
        %1953 = vmatprep.subr.bf16.mxu0 0
        %1954 = vmatpush1.bf16.msra.mxu0 0
        %1955 = vmatprep.subr.bf16.mxu0 0
        %1956 = vmatpush1.bf16.msra.mxu0 0
        %1957 = vmatprep.subr.bf16.mxu0 0
        %1958 = vmatpush1.bf16.msra.mxu0 0
        %1959 = vmatprep.subr.bf16.mxu0 0
        %1960 = vmatpush1.bf16.msra.mxu0 0
        %1961 = vmatprep.subr.bf16.mxu0 0
        %1962 = vmatpush1.bf16.msra.mxu0 0
        %1963 = vmatprep.subr.bf16.mxu0 0
        %1964 = vmatpush1.bf16.msra.mxu0 0
        %1965 = vmatprep.subr.bf16.mxu0 0
        %1966 = vmatpush1.bf16.msra.mxu0 0
        %1967 = vmatprep.subr.bf16.mxu0 0
        %1968 = vmatpush1.bf16.msra.mxu0 0
        %1969 = vmatprep.subr.bf16.mxu0 0
        %1970 = vmatpush1.bf16.msra.mxu0 0
        %1971 = vmatprep.subr.bf16.mxu0 0
        %1972 = vmatpush1.bf16.msra.mxu0 0
        %1973 = vmatprep.subr.bf16.mxu0 0
        %1974 = vmatpush1.bf16.msra.mxu0 0
        %1975 = vmatprep.subr.bf16.mxu0 0
        %1976 = vmatpush1.bf16.msra.mxu0 0
        %1977 = vmatprep.mubr.bf16.mxu0 0
        %1978 = vmatmul.mubr.bf16.gmra.mrb[0].mxu0 %v1943
        %v1979 = vpop.f32.mrb[0].mxu0
        %v1980 = vadd.f32 %v1925, %v1979
        %v1981 = vpop.f32.mrb[0].mxu0
        %v1982 = vpop.f32.mrb[0].mxu0
        %v1983 = vpop.f32.mrb[0].mxu0
        %1984 = vdwg.mxu0
        %v1985 = vld [vmem:[%s18] sm:$0x1]
        %v1987 = vlaneseq
        %v1988 = vshrl.u32 %v1987, 7
        %v1989 = vsub.s32 0, %v1988
        %v1990 = vrot.slane %v1985, %v1989
        %v1992 = vadd.f32 %v1980, %v1990
        %v1993 = vadd.f32 %v1683, %v1992
        %v1994 = vld [vmem:[%s19] sm:$0x1]
        %v1995 = vld [vmem:[%s20] sm:$0x1]
        %v1996 = vsel %vm798, %v1993, 0.0
        %1997 = vadd.xlane.f32.xlu0 %v1996
        %v1998 = vpop.xlane.xlu0 %1997
        %v1999 = vmul.f32 %v1998, %v802
        %v2000 = vsub.f32 %v1993, %v1999
        %v2001 = vmul.f32 %v2000, %v2000
        %v2002 = vsel %vm798, %v2001, 0.0
        %2003 = vadd.xlane.f32.xlu0 %v2002
        %v2004 = vpop.xlane.xlu0 %2003
        %v2005 = vmul.f32 %v2004, %v802
        %v2006 = vadd.f32 %v2005, 1e-05
        %v2007 = vrsqrt.pop %v2006
        %v2008 = vmul.f32 %v2000, %v2007
        %v2010 = vlaneseq
        %v2011 = vshrl.u32 %v2010, 7
        %v2012 = vsub.s32 0, %v2011
        %v2013 = vrot.slane %v1994, %v2012
        %v2015 = vmul.f32 %v2008, %v2013
        %v2017 = vlaneseq
        %v2018 = vshrl.u32 %v2017, 7
        %v2019 = vsub.s32 0, %v2018
        %v2020 = vrot.slane %v1995, %v2019
        %v2022 = vadd.f32 %v2015, %v2020
        %2023 = vst.msk [vmem:[%s789] sm:$0xff] %vm798, %v2022
        %s2024 = sand.u32 %s495, 1
        %s2025 = scalar_lea.sflag [#allocation4], %s2024
        %s2026 = sand.u32 %s495, 1
        %s2027 = smul.addr %s2026, 8
        %s2028 = scalar_lea.vmem [#allocation20], %s2027
        // Predicated region
        $region149: #{tpu_custom_call.1} parent=103 // pred_check
          %p2029 = pneg %p505
        $region150: #{tpu_custom_call.1} parent=103 // pred_check_branch
          %2031 = sbr.rel (%p2029) target = $region152
        $region151: #{tpu_custom_call.1} parent=103 // pred_region
          %s2033 = ssub.s32 128, 128
          %2034 = vsyncadd %s2025, %s2033
          %s2035 = smul.addr %s41, 128
          %s2036 = scalar_lea.hbm %s21, %s2035
          %s2038 = sshll.u32 %s2028, 4
          %s2039 = int_to_ptr.vmem [resolvable:$true] %s2038
          %2041 = dma.vmem_to_hbm [thread:$0]  %s2039, 128, %s2036, %s2025
        $region152: #{tpu_custom_call.1} parent=103 // pred_fallthru
          _
      $region104: #{tpu_custom_call.1} parent=5 // pred_fallthru
        _
      %p2042 = scmp.le.s32.totalorder 2, %s36
      // Predicated region
      $region153: #{tpu_custom_call.1} parent=5 // pred_check
        %p2043 = pneg %p2042
      $region154: #{tpu_custom_call.1} parent=5 // pred_check_branch
        %2045 = sbr.rel (%p2043) target = $region156
      $region155: #{tpu_custom_call.1} parent=5 // pred_region
        %s2046 = ssub.s32 %s36, 2
        // Predicated region
        $region157: #{tpu_custom_call.1} parent=155 // pred_check
          %p2047 = pneg %p511
        $region158: #{tpu_custom_call.1} parent=155 // pred_check_branch
          %2049 = sbr.rel (%p2047) target = $region160
        $region159: #{tpu_custom_call.1} parent=155 // pred_region
          %s2050 = sand.u32 %s496, 1
          %s2051 = scalar_lea.sflag [#allocation4], %s2050
          %s2052 = sand.u32 %s496, 1
          %s2053 = smul.addr %s2052, 8
          %s2054 = scalar_lea.vmem [#allocation20], %s2053
          %2055 = dma.done %s2051, 128
        $region160: #{tpu_custom_call.1} parent=155 // pred_fallthru
          _
      $region156: #{tpu_custom_call.1} parent=5 // pred_fallthru
        _
    $region6: #{tpu_custom_call.1} parent=1 // loop_footer
      %s40 = sadd.s32 1, %s36
    $region7: #{tpu_custom_call.1} parent=1 // loop_footer_branch
      %35 = sbr.rel target = $region3
    $region8: #{tpu_custom_call.1} parent=1 // loop_exit
      _
    %2056 = vsyncpa [#allocation3], 1
    %s2057 = scalar_lea.sflag [#allocation3], 1
    %2058 = vsyncpa %s2057, 1
    %2059 = vsyncpa [#allocation6], 1
    %2060 = vsyncpa [#allocation9], 1
    %2061 = vsyncpa [#allocation12], 1
    %2062 = vsyncpa [#allocation15], 1
    %2063 = vsyncpa [#allocation18], 1
    %2064 = vsyncpa [#allocation4], 1
    %s2065 = scalar_lea.sflag [#allocation4], 1
    %2066 = vsyncpa %s2065, 1

</llo_original>
